<compile_context>
chip_gen: v7x
topology: tpu7x:2x2x1
jax: 0.10.0
libtpu: 0.0.40
codegen_flags: <defaults>
</compile_context>

<pallas_src>
import functools

import jax
import jax.numpy as jnp
import numpy as np
from jax import lax
from jax.experimental import pallas as pl
from jax.experimental.pallas import tpu as pltpu

# ----- GHMR hyperparameters (module __init__ defaults) ----------------------
MU = 0.02
BINS = 10
EDGES = [float(x) / BINS for x in range(BINS + 1)]
EDGES[-1] = 1000.0
MOMENTUM = 0.0
LOSS_WEIGHT = 1.0

LANES = 128        # lane width of a vreg
CHUNK = 64         # rows per in-kernel sub-tile (8 f32 vregs per stream)


def _round_up(x, m):
    return ((x + m - 1) // m) * m


def _accum_chunk(bin_idx, loss, cnt_ref, lsum_ref):
    """Accumulate per-bin (count, loss-sum) partials for one chunk.

    bin_idx / loss: (r, LANES) f32 values.  cnt_ref / lsum_ref are
    (1, BINS, 8, LANES) refs; updates are full-vreg aligned for r a multiple
    of 8 (the common case).  A sub-8-row tail (tiny single-block inputs only)
    takes a (1, LANES) masked-store path.
    """
    r = bin_idx.shape[0]
    r8 = (r // 8) * 8
    if r8:
        b3 = bin_idx[:r8].reshape(r8 // 8, 8, LANES)
        l3 = loss[:r8].reshape(r8 // 8, 8, LANES)
        for i in range(BINS):
            m = b3 == jnp.float32(i)
            cnt_ref[0, i] += jnp.sum(m.astype(jnp.float32), axis=0)
            lsum_ref[0, i] += jnp.sum(jnp.where(m, l3, 0.0), axis=0)
    if r8 < r:
        bt = bin_idx[r8:]
        lt = loss[r8:]
        for i in range(BINS):
            m = bt == jnp.float32(i)
            cnt_ref[0, i, pl.ds(0, 1), :] += jnp.sum(
                m.astype(jnp.float32), axis=0, keepdims=True)
            lsum_ref[0, i, pl.ds(0, 1), :] += jnp.sum(
                jnp.where(m, lt, 0.0), axis=0, keepdims=True)


def _ghmr_kernel(pred_ref, target_ref, lw_ref, cnt_ref, lsum_ref, *,
                 rows, rows_per_block, blocks_per_core, need_mask):
    s = pl.program_id(1)

    @pl.when(s == 0)
    def _init():
        cnt_ref[...] = jnp.zeros_like(cnt_ref)
        lsum_ref[...] = jnp.zeros_like(lsum_ref)

    if need_mask:
        # Logical (unclamped) block id -> first global row of this block.
        # Used only to mask rows past the end of the flattened input
        # (partial final block / phantom block of the 2-core split).
        block_row0 = (pl.program_id(0) * blocks_per_core + s) * rows_per_block

    nrows = pred_ref.shape[0]
    # Register-sized chunks: only one chunk's loss/bin_idx is live at a time
    # (no vreg spills), while the per-bin accumulator RMW is amortised over
    # CHUNK rows so the single vst slot never binds.
    for start in range(0, nrows, CHUNK):
        rc = min(CHUNK, nrows - start)
        pred = pred_ref[pl.ds(start, rc), :].astype(jnp.float32)
        tgt = target_ref[pl.ds(start, rc), :].astype(jnp.float32)
        lw = lw_ref[pl.ds(start, rc), :]           # native dtype; predicate only

        # ASL1 loss and gradient norm via a single rsqrt (EUP slot).
        diff = pred - tgt
        d2 = diff * diff + MU * MU
        rinv = lax.rsqrt(d2)
        loss = d2 * rinv - MU                       # = sqrt(d2) - mu
        g = jnp.abs(diff) * rinv                    # in [0, 1); may round to 1.0

        # Bin index with validity (and OOB rows) folded in as sentinel BINS.
        bin_f = jnp.minimum(jnp.floor(g * BINS), BINS - 1.0)
        valid = lw > 0
        if need_mask:
            row = lax.broadcasted_iota(jnp.int32, (rc, LANES), 0)
            valid = valid & (block_row0 + start + row < rows)
        bin_idx = jnp.where(valid, bin_f, jnp.float32(BINS))

        _accum_chunk(bin_idx, loss, cnt_ref, lsum_ref)


@functools.partial(jax.jit, static_argnames=("block_rows",))
def ghmr_loss(pred, target, label_weight, *, block_rows=1024):
    """GHMR forward. pred/target/label_weight: [batch_num, 4 (*class_num)]."""
    total = pred.size
    p = jnp.ravel(pred)
    t = jnp.ravel(target)
    w = jnp.ravel(label_weight)

    pad = (-total) % LANES
    if pad:
        # Only taken when the element count is not a multiple of 128.
        # Padding carries label_weight == 0 (ignored).
        p = jnp.pad(p, (0, pad))
        t = jnp.pad(t, (0, pad))
        w = jnp.pad(w, (0, pad))
    rows = (total + pad) // LANES
    p = p.reshape(rows, LANES)
    t = t.reshape(rows, LANES)
    w = w.reshape(rows, LANES)

    brc = _round_up(max(block_rows, CHUNK), CHUNK)
    br = rows if rows <= brc else brc               # full-array block when small
    nblocks = pl.cdiv(rows, br)
    ncores = 2 if nblocks >= 2 else 1               # v7x: 2 TCs; no-op on 1-TC chips
    spc = pl.cdiv(nblocks, ncores)                  # row-blocks per core
    need_mask = (ncores * spc * br) != rows         # partial / phantom blocks exist

    def in_map(c, s):
        # Clamp so a phantom block (odd block count, 2-core split) re-reads the
        # last real block; its rows are fully masked in-kernel.
        return (jnp.minimum(c * spc + s, nblocks - 1), 0)

    def out_map(c, s):
        return (c, 0, 0, 0)

    kernel = functools.partial(
        _ghmr_kernel, rows=rows, rows_per_block=br,
        blocks_per_core=spc, need_mask=need_mask)

    cost = pl.CostEstimate(
        flops=70 * total,
        transcendentals=total,
        bytes_accessed=total * (p.dtype.itemsize + t.dtype.itemsize
                                + w.dtype.itemsize))

    cnt, lsum = pl.pallas_call(
        kernel,
        out_shape=(
            jax.ShapeDtypeStruct((ncores, BINS, 8, LANES), jnp.float32),
            jax.ShapeDtypeStruct((ncores, BINS, 8, LANES), jnp.float32),
        ),
        grid_spec=pltpu.PrefetchScalarGridSpec(
            num_scalar_prefetch=0,
            grid=(ncores, spc),
            in_specs=[
                pl.BlockSpec((br, LANES), in_map),
                pl.BlockSpec((br, LANES), in_map),
                pl.BlockSpec((br, LANES), in_map),
            ],
            out_specs=(
                pl.BlockSpec((1, BINS, 8, LANES), out_map),
                pl.BlockSpec((1, BINS, 8, LANES), out_map),
            ),
        ),
        compiler_params=pltpu.CompilerParams(
            dimension_semantics=("parallel", "arbitrary")),
        cost_estimate=cost,
    )(p, t, w)

    # Tiny finalize as plain XLA ops (the reference's `tot` factor cancels):
    #   loss = loss_weight / n * sum_i loss_sum_i / count_i  (non-empty bins)
    counts = jnp.sum(cnt, axis=(0, 2, 3))           # (BINS,)
    lsums = jnp.sum(lsum, axis=(0, 2, 3))            # (BINS,)
    has = counts > 0.0
    n = jnp.sum(has.astype(jnp.float32))
    per_bin = jnp.where(has, lsums / jnp.maximum(counts, 1.0), 0.0)
    loss = jnp.where(n > 0.0, jnp.sum(per_bin) / jnp.maximum(n, 1.0), 0.0)
    return loss * LOSS_WEIGHT


def _ghmr_reference(pred, target, label_weight):
    """Pure-numpy reference mirroring the PyTorch forward exactly."""
    pred = np.asarray(pred, np.float32)
    target = np.asarray(target, np.float32)
    lw = np.asarray(label_weight, np.float32)
    diff = pred - target
    loss = np.sqrt(diff * diff + MU * MU) - MU
    g = np.abs(diff / np.sqrt(MU * MU + diff * diff))
    weights = np.zeros_like(g)
    valid = lw > 0
    tot = max(float(lw.sum()), 1.0)
    n = 0
    for i in range(BINS):
        inds = (g >= EDGES[i]) & (g < EDGES[i + 1]) & valid
        num_in_bin = int(inds.sum())
        if num_in_bin > 0:
            n += 1
            weights[inds] = tot / num_in_bin
    if n > 0:
        weights /= n
    return float((loss * weights).sum() / tot * LOSS_WEIGHT)


if __name__ == "__main__":
    key = jax.random.PRNGKey(0)

    def make(batch_num, channels, salt):
        k1, k2, k3 = jax.random.split(jax.random.fold_in(key, salt), 3)
        pred = jax.random.normal(k1, (batch_num, channels), dtype=jnp.float32)
        target = jax.random.normal(k2, (batch_num, channels), dtype=jnp.float32)
        lw = (jax.random.uniform(k3, (batch_num, channels)) > 0.2).astype(
            jnp.float32)
        return pred, target, lw

    # (name, batch_num, channels, block_rows) — exercises: single full-array
    # block (no pad), the pad + ragged-chunk path, the 2-core split with a
    # partial final block, and the 2-core split with a phantom (fully masked)
    # block.  All shapes are small [batch_num, 4] box-regression tensors.
    cases = [
        ("single-block, no pad", 320, 4, 1024),
        ("pad path, ragged chunk", 300, 4, 1024),
        ("2-core split, partial block", 2080, 4, 64),
        ("2-core split, phantom block", 4160, 4, 64),
    ]
    for idx, (name, bn, ch, br) in enumerate(cases):
        pred, target, lw = make(bn, ch, idx)
        out = jax.block_until_ready(
            ghmr_loss(pred, target, lw, block_rows=br))
        ref = _ghmr_reference(pred, target, lw)
        assert np.allclose(float(out), ref, rtol=1e-4, atol=1e-5), (
            name, float(out), ref)

    print("KERNEL_OK")
</pallas_src>

<mosaic_0001>
module attributes {stable_mosaic.version = 11 : i64} {
  func.func @_ghmr_kernel(%arg0: i32, %arg1: i32, %arg2: memref<10x128xf32, #tpu.memory_space<vmem>>, %arg3: memref<10x128xf32, #tpu.memory_space<vmem>>, %arg4: memref<10x128xf32, #tpu.memory_space<vmem>>, %arg5: memref<1x10x8x128xf32, #tpu.memory_space<vmem>>, %arg6: memref<1x10x8x128xf32, #tpu.memory_space<vmem>>) attributes {dimension_semantics = [#tpu.dimension_semantics<parallel>, #tpu.dimension_semantics<arbitrary>], iteration_bounds = array<i64: 1, 1>, scalar_prefetch = 0 : i64, scratch_operands = 0 : i64, tpu.core_type = #tpu.core_type<tc>, window_params = [{transform_indices = @transform_0, window_bounds = array<i64: 10, 128>}, {transform_indices = @transform_1, window_bounds = array<i64: 10, 128>}, {transform_indices = @transform_2, window_bounds = array<i64: 10, 128>}, {transform_indices = @transform_3, window_bounds = array<i64: 1, 10, 8, 128>}, {transform_indices = @transform_4, window_bounds = array<i64: 1, 10, 8, 128>}]} {
    %c0_i32 = arith.constant 0 : i32
    %0 = arith.cmpi eq, %arg1, %c0_i32 : i32
    %1 = arith.extui %0 : i1 to i32
    %c0_i32_0 = arith.constant 0 : i32
    %2 = arith.cmpi ne, %1, %c0_i32_0 : i32
    scf.if %2 {
      %cst_402 = arith.constant 0.000000e+00 : f32
      %451 = vector.broadcast %cst_402 : f32 to vector<1x10x8x128xf32>
      %c0_403 = arith.constant 0 : index
      %c0_404 = arith.constant 0 : index
      %c0_405 = arith.constant 0 : index
      %c0_406 = arith.constant 0 : index
      %452 = vector.load %arg5[%c0_403, %c0_404, %c0_405, %c0_406] : memref<1x10x8x128xf32, #tpu.memory_space<vmem>>, vector<1x10x8x128xf32>
      tpu.vector_store %arg5[%c0_403, %c0_404, %c0_405, %c0_406], %451 {strides = array<i32>} : memref<1x10x8x128xf32, #tpu.memory_space<vmem>>, vector<1x10x8x128xf32>,
      %cst_407 = arith.constant 0.000000e+00 : f32
      %453 = vector.broadcast %cst_407 : f32 to vector<1x10x8x128xf32>
      %c0_408 = arith.constant 0 : index
      %c0_409 = arith.constant 0 : index
      %c0_410 = arith.constant 0 : index
      %c0_411 = arith.constant 0 : index
      %454 = vector.load %arg6[%c0_408, %c0_409, %c0_410, %c0_411] : memref<1x10x8x128xf32, #tpu.memory_space<vmem>>, vector<1x10x8x128xf32>
      tpu.vector_store %arg6[%c0_408, %c0_409, %c0_410, %c0_411], %453 {strides = array<i32>} : memref<1x10x8x128xf32, #tpu.memory_space<vmem>>, vector<1x10x8x128xf32>,
    } else {
    }
    %c0 = arith.constant 0 : index
    %c0_1 = arith.constant 0 : index
    %3 = vector.load %arg2[%c0, %c0_1] : memref<10x128xf32, #tpu.memory_space<vmem>>, vector<10x128xf32>
    %c0_2 = arith.constant 0 : index
    %c0_3 = arith.constant 0 : index
    %4 = vector.load %arg3[%c0_2, %c0_3] : memref<10x128xf32, #tpu.memory_space<vmem>>, vector<10x128xf32>
    %c0_4 = arith.constant 0 : index
    %c0_5 = arith.constant 0 : index
    %5 = vector.load %arg4[%c0_4, %c0_5] : memref<10x128xf32, #tpu.memory_space<vmem>>, vector<10x128xf32>
    %6 = arith.subf %3, %4 : vector<10x128xf32>
    %7 = arith.mulf %6, %6 : vector<10x128xf32>
    %cst = arith.constant 4.000000e-04 : f32
    %8 = vector.broadcast %cst : f32 to vector<10x128xf32>
    %9 = arith.addf %7, %8 : vector<10x128xf32>
    %10 = math.rsqrt %9 : vector<10x128xf32>
    %11 = arith.mulf %9, %10 : vector<10x128xf32>
    %cst_6 = arith.constant 2.000000e-02 : f32
    %12 = vector.broadcast %cst_6 : f32 to vector<10x128xf32>
    %13 = arith.subf %11, %12 : vector<10x128xf32>
    %14 = math.absf %6 : vector<10x128xf32>
    %15 = arith.mulf %14, %10 : vector<10x128xf32>
    %cst_7 = arith.constant 1.000000e+01 : f32
    %16 = vector.broadcast %cst_7 : f32 to vector<10x128xf32>
    %17 = arith.mulf %15, %16 : vector<10x128xf32>
    %18 = math.floor %17 : vector<10x128xf32>
    %cst_8 = arith.constant 9.000000e+00 : f32
    %19 = vector.broadcast %cst_8 : f32 to vector<10x128xf32>
    %20 = arith.minimumf %18, %19 : vector<10x128xf32>
    %cst_9 = arith.constant 0.000000e+00 : f32
    %21 = vector.broadcast %cst_9 : f32 to vector<10x128xf32>
    %22 = arith.cmpf ogt, %5, %21 : vector<10x128xf32>
    %cst_10 = arith.constant 1.000000e+01 : f32
    %23 = vector.broadcast %cst_10 : f32 to vector<10x128xf32>
    %24 = arith.select %22, %20, %23 : vector<10x128xi1>, vector<10x128xf32>
    %25 = vector.extract_strided_slice %24 {offsets = [0, 0], sizes = [8, 128], strides = [1, 1]} : vector<10x128xf32> to vector<8x128xf32>
    %26 = vector.shape_cast %25 : vector<8x128xf32> to vector<1x8x128xf32>
    %27 = vector.extract_strided_slice %13 {offsets = [0, 0], sizes = [8, 128], strides = [1, 1]} : vector<10x128xf32> to vector<8x128xf32>
    %28 = vector.shape_cast %27 : vector<8x128xf32> to vector<1x8x128xf32>
    %cst_11 = arith.constant 0.000000e+00 : f32
    %29 = vector.broadcast %cst_11 : f32 to vector<1x8x128xf32>
    %30 = arith.cmpf oeq, %26, %29 : vector<1x8x128xf32>
    %c0_12 = arith.constant 0 : index
    %c0_13 = arith.constant 0 : index
    %c0_14 = arith.constant 0 : index
    %c0_15 = arith.constant 0 : index
    %31 = vector.load %arg5[%c0_12, %c0_13, %c0_14, %c0_15] : memref<1x10x8x128xf32, #tpu.memory_space<vmem>>, vector<1x1x8x128xf32>
    %32 = vector.shape_cast %31 : vector<1x1x8x128xf32> to vector<8x128xf32>
    %33 = arith.extui %30 : vector<1x8x128xi1> to vector<1x8x128xi32>
    %34 = arith.sitofp %33 : vector<1x8x128xi32> to vector<1x8x128xf32>
    %cst_16 = arith.constant dense<0.000000e+00> : vector<8x128xf32>
    %35 = vector.multi_reduction <add>, %34, %cst_16 [0] : vector<1x8x128xf32> to vector<8x128xf32>
    %36 = arith.addf %32, %35 : vector<8x128xf32>
    %c0_17 = arith.constant 0 : index
    %c0_18 = arith.constant 0 : index
    %c0_19 = arith.constant 0 : index
    %c0_20 = arith.constant 0 : index
    %37 = vector.load %arg5[%c0_17, %c0_18, %c0_19, %c0_20] : memref<1x10x8x128xf32, #tpu.memory_space<vmem>>, vector<1x1x8x128xf32>
    %38 = vector.shape_cast %37 : vector<1x1x8x128xf32> to vector<8x128xf32>
    %39 = vector.shape_cast %36 : vector<8x128xf32> to vector<1x1x8x128xf32>
    tpu.vector_store %arg5[%c0_17, %c0_18, %c0_19, %c0_20], %39 {strides = array<i32>} : memref<1x10x8x128xf32, #tpu.memory_space<vmem>>, vector<1x1x8x128xf32>,
    %c0_21 = arith.constant 0 : index
    %c0_22 = arith.constant 0 : index
    %c0_23 = arith.constant 0 : index
    %c0_24 = arith.constant 0 : index
    %40 = vector.load %arg6[%c0_21, %c0_22, %c0_23, %c0_24] : memref<1x10x8x128xf32, #tpu.memory_space<vmem>>, vector<1x1x8x128xf32>
    %41 = vector.shape_cast %40 : vector<1x1x8x128xf32> to vector<8x128xf32>
    %cst_25 = arith.constant 0.000000e+00 : f32
    %42 = vector.broadcast %cst_25 : f32 to vector<1x8x128xf32>
    %43 = arith.select %30, %28, %42 : vector<1x8x128xi1>, vector<1x8x128xf32>
    %cst_26 = arith.constant dense<0.000000e+00> : vector<8x128xf32>
    %44 = vector.multi_reduction <add>, %43, %cst_26 [0] : vector<1x8x128xf32> to vector<8x128xf32>
    %45 = arith.addf %41, %44 : vector<8x128xf32>
    %c0_27 = arith.constant 0 : index
    %c0_28 = arith.constant 0 : index
    %c0_29 = arith.constant 0 : index
    %c0_30 = arith.constant 0 : index
    %46 = vector.load %arg6[%c0_27, %c0_28, %c0_29, %c0_30] : memref<1x10x8x128xf32, #tpu.memory_space<vmem>>, vector<1x1x8x128xf32>
    %47 = vector.shape_cast %46 : vector<1x1x8x128xf32> to vector<8x128xf32>
    %48 = vector.shape_cast %45 : vector<8x128xf32> to vector<1x1x8x128xf32>
    tpu.vector_store %arg6[%c0_27, %c0_28, %c0_29, %c0_30], %48 {strides = array<i32>} : memref<1x10x8x128xf32, #tpu.memory_space<vmem>>, vector<1x1x8x128xf32>,
    %cst_31 = arith.constant 1.000000e+00 : f32
    %49 = vector.broadcast %cst_31 : f32 to vector<1x8x128xf32>
    %50 = arith.cmpf oeq, %26, %49 : vector<1x8x128xf32>
    %c0_32 = arith.constant 0 : index
    %c1 = arith.constant 1 : index
    %c0_33 = arith.constant 0 : index
    %c0_34 = arith.constant 0 : index
    %51 = vector.load %arg5[%c0_32, %c1, %c0_33, %c0_34] : memref<1x10x8x128xf32, #tpu.memory_space<vmem>>, vector<1x1x8x128xf32>
    %52 = vector.shape_cast %51 : vector<1x1x8x128xf32> to vector<8x128xf32>
    %53 = arith.extui %50 : vector<1x8x128xi1> to vector<1x8x128xi32>
    %54 = arith.sitofp %53 : vector<1x8x128xi32> to vector<1x8x128xf32>
    %cst_35 = arith.constant dense<0.000000e+00> : vector<8x128xf32>
    %55 = vector.multi_reduction <add>, %54, %cst_35 [0] : vector<1x8x128xf32> to vector<8x128xf32>
    %56 = arith.addf %52, %55 : vector<8x128xf32>
    %c0_36 = arith.constant 0 : index
    %c1_37 = arith.constant 1 : index
    %c0_38 = arith.constant 0 : index
    %c0_39 = arith.constant 0 : index
    %57 = vector.load %arg5[%c0_36, %c1_37, %c0_38, %c0_39] : memref<1x10x8x128xf32, #tpu.memory_space<vmem>>, vector<1x1x8x128xf32>
    %58 = vector.shape_cast %57 : vector<1x1x8x128xf32> to vector<8x128xf32>
    %59 = vector.shape_cast %56 : vector<8x128xf32> to vector<1x1x8x128xf32>
    tpu.vector_store %arg5[%c0_36, %c1_37, %c0_38, %c0_39], %59 {strides = array<i32>} : memref<1x10x8x128xf32, #tpu.memory_space<vmem>>, vector<1x1x8x128xf32>,
    %c0_40 = arith.constant 0 : index
    %c1_41 = arith.constant 1 : index
    %c0_42 = arith.constant 0 : index
    %c0_43 = arith.constant 0 : index
    %60 = vector.load %arg6[%c0_40, %c1_41, %c0_42, %c0_43] : memref<1x10x8x128xf32, #tpu.memory_space<vmem>>, vector<1x1x8x128xf32>
    %61 = vector.shape_cast %60 : vector<1x1x8x128xf32> to vector<8x128xf32>
    %cst_44 = arith.constant 0.000000e+00 : f32
    %62 = vector.broadcast %cst_44 : f32 to vector<1x8x128xf32>
    %63 = arith.select %50, %28, %62 : vector<1x8x128xi1>, vector<1x8x128xf32>
    %cst_45 = arith.constant dense<0.000000e+00> : vector<8x128xf32>
    %64 = vector.multi_reduction <add>, %63, %cst_45 [0] : vector<1x8x128xf32> to vector<8x128xf32>
    %65 = arith.addf %61, %64 : vector<8x128xf32>
    %c0_46 = arith.constant 0 : index
    %c1_47 = arith.constant 1 : index
    %c0_48 = arith.constant 0 : index
    %c0_49 = arith.constant 0 : index
    %66 = vector.load %arg6[%c0_46, %c1_47, %c0_48, %c0_49] : memref<1x10x8x128xf32, #tpu.memory_space<vmem>>, vector<1x1x8x128xf32>
    %67 = vector.shape_cast %66 : vector<1x1x8x128xf32> to vector<8x128xf32>
    %68 = vector.shape_cast %65 : vector<8x128xf32> to vector<1x1x8x128xf32>
    tpu.vector_store %arg6[%c0_46, %c1_47, %c0_48, %c0_49], %68 {strides = array<i32>} : memref<1x10x8x128xf32, #tpu.memory_space<vmem>>, vector<1x1x8x128xf32>,
    %cst_50 = arith.constant 2.000000e+00 : f32
    %69 = vector.broadcast %cst_50 : f32 to vector<1x8x128xf32>
    %70 = arith.cmpf oeq, %26, %69 : vector<1x8x128xf32>
    %c0_51 = arith.constant 0 : index
    %c2 = arith.constant 2 : index
    %c0_52 = arith.constant 0 : index
    %c0_53 = arith.constant 0 : index
    %71 = vector.load %arg5[%c0_51, %c2, %c0_52, %c0_53] : memref<1x10x8x128xf32, #tpu.memory_space<vmem>>, vector<1x1x8x128xf32>
    %72 = vector.shape_cast %71 : vector<1x1x8x128xf32> to vector<8x128xf32>
    %73 = arith.extui %70 : vector<1x8x128xi1> to vector<1x8x128xi32>
    %74 = arith.sitofp %73 : vector<1x8x128xi32> to vector<1x8x128xf32>
    %cst_54 = arith.constant dense<0.000000e+00> : vector<8x128xf32>
    %75 = vector.multi_reduction <add>, %74, %cst_54 [0] : vector<1x8x128xf32> to vector<8x128xf32>
    %76 = arith.addf %72, %75 : vector<8x128xf32>
    %c0_55 = arith.constant 0 : index
    %c2_56 = arith.constant 2 : index
    %c0_57 = arith.constant 0 : index
    %c0_58 = arith.constant 0 : index
    %77 = vector.load %arg5[%c0_55, %c2_56, %c0_57, %c0_58] : memref<1x10x8x128xf32, #tpu.memory_space<vmem>>, vector<1x1x8x128xf32>
    %78 = vector.shape_cast %77 : vector<1x1x8x128xf32> to vector<8x128xf32>
    %79 = vector.shape_cast %76 : vector<8x128xf32> to vector<1x1x8x128xf32>
    tpu.vector_store %arg5[%c0_55, %c2_56, %c0_57, %c0_58], %79 {strides = array<i32>} : memref<1x10x8x128xf32, #tpu.memory_space<vmem>>, vector<1x1x8x128xf32>,
    %c0_59 = arith.constant 0 : index
    %c2_60 = arith.constant 2 : index
    %c0_61 = arith.constant 0 : index
    %c0_62 = arith.constant 0 : index
    %80 = vector.load %arg6[%c0_59, %c2_60, %c0_61, %c0_62] : memref<1x10x8x128xf32, #tpu.memory_space<vmem>>, vector<1x1x8x128xf32>
    %81 = vector.shape_cast %80 : vector<1x1x8x128xf32> to vector<8x128xf32>
    %cst_63 = arith.constant 0.000000e+00 : f32
    %82 = vector.broadcast %cst_63 : f32 to vector<1x8x128xf32>
    %83 = arith.select %70, %28, %82 : vector<1x8x128xi1>, vector<1x8x128xf32>
    %cst_64 = arith.constant dense<0.000000e+00> : vector<8x128xf32>
    %84 = vector.multi_reduction <add>, %83, %cst_64 [0] : vector<1x8x128xf32> to vector<8x128xf32>
    %85 = arith.addf %81, %84 : vector<8x128xf32>
    %c0_65 = arith.constant 0 : index
    %c2_66 = arith.constant 2 : index
    %c0_67 = arith.constant 0 : index
    %c0_68 = arith.constant 0 : index
    %86 = vector.load %arg6[%c0_65, %c2_66, %c0_67, %c0_68] : memref<1x10x8x128xf32, #tpu.memory_space<vmem>>, vector<1x1x8x128xf32>
    %87 = vector.shape_cast %86 : vector<1x1x8x128xf32> to vector<8x128xf32>
    %88 = vector.shape_cast %85 : vector<8x128xf32> to vector<1x1x8x128xf32>
    tpu.vector_store %arg6[%c0_65, %c2_66, %c0_67, %c0_68], %88 {strides = array<i32>} : memref<1x10x8x128xf32, #tpu.memory_space<vmem>>, vector<1x1x8x128xf32>,
    %cst_69 = arith.constant 3.000000e+00 : f32
    %89 = vector.broadcast %cst_69 : f32 to vector<1x8x128xf32>
    %90 = arith.cmpf oeq, %26, %89 : vector<1x8x128xf32>
    %c0_70 = arith.constant 0 : index
    %c3 = arith.constant 3 : index
    %c0_71 = arith.constant 0 : index
    %c0_72 = arith.constant 0 : index
    %91 = vector.load %arg5[%c0_70, %c3, %c0_71, %c0_72] : memref<1x10x8x128xf32, #tpu.memory_space<vmem>>, vector<1x1x8x128xf32>
    %92 = vector.shape_cast %91 : vector<1x1x8x128xf32> to vector<8x128xf32>
    %93 = arith.extui %90 : vector<1x8x128xi1> to vector<1x8x128xi32>
    %94 = arith.sitofp %93 : vector<1x8x128xi32> to vector<1x8x128xf32>
    %cst_73 = arith.constant dense<0.000000e+00> : vector<8x128xf32>
    %95 = vector.multi_reduction <add>, %94, %cst_73 [0] : vector<1x8x128xf32> to vector<8x128xf32>
    %96 = arith.addf %92, %95 : vector<8x128xf32>
    %c0_74 = arith.constant 0 : index
    %c3_75 = arith.constant 3 : index
    %c0_76 = arith.constant 0 : index
    %c0_77 = arith.constant 0 : index
    %97 = vector.load %arg5[%c0_74, %c3_75, %c0_76, %c0_77] : memref<1x10x8x128xf32, #tpu.memory_space<vmem>>, vector<1x1x8x128xf32>
    %98 = vector.shape_cast %97 : vector<1x1x8x128xf32> to vector<8x128xf32>
    %99 = vector.shape_cast %96 : vector<8x128xf32> to vector<1x1x8x128xf32>
    tpu.vector_store %arg5[%c0_74, %c3_75, %c0_76, %c0_77], %99 {strides = array<i32>} : memref<1x10x8x128xf32, #tpu.memory_space<vmem>>, vector<1x1x8x128xf32>,
    %c0_78 = arith.constant 0 : index
    %c3_79 = arith.constant 3 : index
    %c0_80 = arith.constant 0 : index
    %c0_81 = arith.constant 0 : index
    %100 = vector.load %arg6[%c0_78, %c3_79, %c0_80, %c0_81] : memref<1x10x8x128xf32, #tpu.memory_space<vmem>>, vector<1x1x8x128xf32>
    %101 = vector.shape_cast %100 : vector<1x1x8x128xf32> to vector<8x128xf32>
    %cst_82 = arith.constant 0.000000e+00 : f32
    %102 = vector.broadcast %cst_82 : f32 to vector<1x8x128xf32>
    %103 = arith.select %90, %28, %102 : vector<1x8x128xi1>, vector<1x8x128xf32>
    %cst_83 = arith.constant dense<0.000000e+00> : vector<8x128xf32>
    %104 = vector.multi_reduction <add>, %103, %cst_83 [0] : vector<1x8x128xf32> to vector<8x128xf32>
    %105 = arith.addf %101, %104 : vector<8x128xf32>
    %c0_84 = arith.constant 0 : index
    %c3_85 = arith.constant 3 : index
    %c0_86 = arith.constant 0 : index
    %c0_87 = arith.constant 0 : index
    %106 = vector.load %arg6[%c0_84, %c3_85, %c0_86, %c0_87] : memref<1x10x8x128xf32, #tpu.memory_space<vmem>>, vector<1x1x8x128xf32>
    %107 = vector.shape_cast %106 : vector<1x1x8x128xf32> to vector<8x128xf32>
    %108 = vector.shape_cast %105 : vector<8x128xf32> to vector<1x1x8x128xf32>
    tpu.vector_store %arg6[%c0_84, %c3_85, %c0_86, %c0_87], %108 {strides = array<i32>} : memref<1x10x8x128xf32, #tpu.memory_space<vmem>>, vector<1x1x8x128xf32>,
    %cst_88 = arith.constant 4.000000e+00 : f32
    %109 = vector.broadcast %cst_88 : f32 to vector<1x8x128xf32>
    %110 = arith.cmpf oeq, %26, %109 : vector<1x8x128xf32>
    %c0_89 = arith.constant 0 : index
    %c4 = arith.constant 4 : index
    %c0_90 = arith.constant 0 : index
    %c0_91 = arith.constant 0 : index
    %111 = vector.load %arg5[%c0_89, %c4, %c0_90, %c0_91] : memref<1x10x8x128xf32, #tpu.memory_space<vmem>>, vector<1x1x8x128xf32>
    %112 = vector.shape_cast %111 : vector<1x1x8x128xf32> to vector<8x128xf32>
    %113 = arith.extui %110 : vector<1x8x128xi1> to vector<1x8x128xi32>
    %114 = arith.sitofp %113 : vector<1x8x128xi32> to vector<1x8x128xf32>
    %cst_92 = arith.constant dense<0.000000e+00> : vector<8x128xf32>
    %115 = vector.multi_reduction <add>, %114, %cst_92 [0] : vector<1x8x128xf32> to vector<8x128xf32>
    %116 = arith.addf %112, %115 : vector<8x128xf32>
    %c0_93 = arith.constant 0 : index
    %c4_94 = arith.constant 4 : index
    %c0_95 = arith.constant 0 : index
    %c0_96 = arith.constant 0 : index
    %117 = vector.load %arg5[%c0_93, %c4_94, %c0_95, %c0_96] : memref<1x10x8x128xf32, #tpu.memory_space<vmem>>, vector<1x1x8x128xf32>
    %118 = vector.shape_cast %117 : vector<1x1x8x128xf32> to vector<8x128xf32>
    %119 = vector.shape_cast %116 : vector<8x128xf32> to vector<1x1x8x128xf32>
    tpu.vector_store %arg5[%c0_93, %c4_94, %c0_95, %c0_96], %119 {strides = array<i32>} : memref<1x10x8x128xf32, #tpu.memory_space<vmem>>, vector<1x1x8x128xf32>,
    %c0_97 = arith.constant 0 : index
    %c4_98 = arith.constant 4 : index
    %c0_99 = arith.constant 0 : index
    %c0_100 = arith.constant 0 : index
    %120 = vector.load %arg6[%c0_97, %c4_98, %c0_99, %c0_100] : memref<1x10x8x128xf32, #tpu.memory_space<vmem>>, vector<1x1x8x128xf32>
    %121 = vector.shape_cast %120 : vector<1x1x8x128xf32> to vector<8x128xf32>
    %cst_101 = arith.constant 0.000000e+00 : f32
    %122 = vector.broadcast %cst_101 : f32 to vector<1x8x128xf32>
    %123 = arith.select %110, %28, %122 : vector<1x8x128xi1>, vector<1x8x128xf32>
    %cst_102 = arith.constant dense<0.000000e+00> : vector<8x128xf32>
    %124 = vector.multi_reduction <add>, %123, %cst_102 [0] : vector<1x8x128xf32> to vector<8x128xf32>
    %125 = arith.addf %121, %124 : vector<8x128xf32>
    %c0_103 = arith.constant 0 : index
    %c4_104 = arith.constant 4 : index
    %c0_105 = arith.constant 0 : index
    %c0_106 = arith.constant 0 : index
    %126 = vector.load %arg6[%c0_103, %c4_104, %c0_105, %c0_106] : memref<1x10x8x128xf32, #tpu.memory_space<vmem>>, vector<1x1x8x128xf32>
    %127 = vector.shape_cast %126 : vector<1x1x8x128xf32> to vector<8x128xf32>
    %128 = vector.shape_cast %125 : vector<8x128xf32> to vector<1x1x8x128xf32>
    tpu.vector_store %arg6[%c0_103, %c4_104, %c0_105, %c0_106], %128 {strides = array<i32>} : memref<1x10x8x128xf32, #tpu.memory_space<vmem>>, vector<1x1x8x128xf32>,
    %cst_107 = arith.constant 5.000000e+00 : f32
    %129 = vector.broadcast %cst_107 : f32 to vector<1x8x128xf32>
    %130 = arith.cmpf oeq, %26, %129 : vector<1x8x128xf32>
    %c0_108 = arith.constant 0 : index
    %c5 = arith.constant 5 : index
    %c0_109 = arith.constant 0 : index
    %c0_110 = arith.constant 0 : index
    %131 = vector.load %arg5[%c0_108, %c5, %c0_109, %c0_110] : memref<1x10x8x128xf32, #tpu.memory_space<vmem>>, vector<1x1x8x128xf32>
    %132 = vector.shape_cast %131 : vector<1x1x8x128xf32> to vector<8x128xf32>
    %133 = arith.extui %130 : vector<1x8x128xi1> to vector<1x8x128xi32>
    %134 = arith.sitofp %133 : vector<1x8x128xi32> to vector<1x8x128xf32>
    %cst_111 = arith.constant dense<0.000000e+00> : vector<8x128xf32>
    %135 = vector.multi_reduction <add>, %134, %cst_111 [0] : vector<1x8x128xf32> to vector<8x128xf32>
    %136 = arith.addf %132, %135 : vector<8x128xf32>
    %c0_112 = arith.constant 0 : index
    %c5_113 = arith.constant 5 : index
    %c0_114 = arith.constant 0 : index
    %c0_115 = arith.constant 0 : index
    %137 = vector.load %arg5[%c0_112, %c5_113, %c0_114, %c0_115] : memref<1x10x8x128xf32, #tpu.memory_space<vmem>>, vector<1x1x8x128xf32>
    %138 = vector.shape_cast %137 : vector<1x1x8x128xf32> to vector<8x128xf32>
    %139 = vector.shape_cast %136 : vector<8x128xf32> to vector<1x1x8x128xf32>
    tpu.vector_store %arg5[%c0_112, %c5_113, %c0_114, %c0_115], %139 {strides = array<i32>} : memref<1x10x8x128xf32, #tpu.memory_space<vmem>>, vector<1x1x8x128xf32>,
    %c0_116 = arith.constant 0 : index
    %c5_117 = arith.constant 5 : index
    %c0_118 = arith.constant 0 : index
    %c0_119 = arith.constant 0 : index
    %140 = vector.load %arg6[%c0_116, %c5_117, %c0_118, %c0_119] : memref<1x10x8x128xf32, #tpu.memory_space<vmem>>, vector<1x1x8x128xf32>
    %141 = vector.shape_cast %140 : vector<1x1x8x128xf32> to vector<8x128xf32>
    %cst_120 = arith.constant 0.000000e+00 : f32
    %142 = vector.broadcast %cst_120 : f32 to vector<1x8x128xf32>
    %143 = arith.select %130, %28, %142 : vector<1x8x128xi1>, vector<1x8x128xf32>
    %cst_121 = arith.constant dense<0.000000e+00> : vector<8x128xf32>
    %144 = vector.multi_reduction <add>, %143, %cst_121 [0] : vector<1x8x128xf32> to vector<8x128xf32>
    %145 = arith.addf %141, %144 : vector<8x128xf32>
    %c0_122 = arith.constant 0 : index
    %c5_123 = arith.constant 5 : index
    %c0_124 = arith.constant 0 : index
    %c0_125 = arith.constant 0 : index
    %146 = vector.load %arg6[%c0_122, %c5_123, %c0_124, %c0_125] : memref<1x10x8x128xf32, #tpu.memory_space<vmem>>, vector<1x1x8x128xf32>
    %147 = vector.shape_cast %146 : vector<1x1x8x128xf32> to vector<8x128xf32>
    %148 = vector.shape_cast %145 : vector<8x128xf32> to vector<1x1x8x128xf32>
    tpu.vector_store %arg6[%c0_122, %c5_123, %c0_124, %c0_125], %148 {strides = array<i32>} : memref<1x10x8x128xf32, #tpu.memory_space<vmem>>, vector<1x1x8x128xf32>,
    %cst_126 = arith.constant 6.000000e+00 : f32
    %149 = vector.broadcast %cst_126 : f32 to vector<1x8x128xf32>
    %150 = arith.cmpf oeq, %26, %149 : vector<1x8x128xf32>
    %c0_127 = arith.constant 0 : index
    %c6 = arith.constant 6 : index
    %c0_128 = arith.constant 0 : index
    %c0_129 = arith.constant 0 : index
    %151 = vector.load %arg5[%c0_127, %c6, %c0_128, %c0_129] : memref<1x10x8x128xf32, #tpu.memory_space<vmem>>, vector<1x1x8x128xf32>
    %152 = vector.shape_cast %151 : vector<1x1x8x128xf32> to vector<8x128xf32>
    %153 = arith.extui %150 : vector<1x8x128xi1> to vector<1x8x128xi32>
    %154 = arith.sitofp %153 : vector<1x8x128xi32> to vector<1x8x128xf32>
    %cst_130 = arith.constant dense<0.000000e+00> : vector<8x128xf32>
    %155 = vector.multi_reduction <add>, %154, %cst_130 [0] : vector<1x8x128xf32> to vector<8x128xf32>
    %156 = arith.addf %152, %155 : vector<8x128xf32>
    %c0_131 = arith.constant 0 : index
    %c6_132 = arith.constant 6 : index
    %c0_133 = arith.constant 0 : index
    %c0_134 = arith.constant 0 : index
    %157 = vector.load %arg5[%c0_131, %c6_132, %c0_133, %c0_134] : memref<1x10x8x128xf32, #tpu.memory_space<vmem>>, vector<1x1x8x128xf32>
    %158 = vector.shape_cast %157 : vector<1x1x8x128xf32> to vector<8x128xf32>
    %159 = vector.shape_cast %156 : vector<8x128xf32> to vector<1x1x8x128xf32>
    tpu.vector_store %arg5[%c0_131, %c6_132, %c0_133, %c0_134], %159 {strides = array<i32>} : memref<1x10x8x128xf32, #tpu.memory_space<vmem>>, vector<1x1x8x128xf32>,
    %c0_135 = arith.constant 0 : index
    %c6_136 = arith.constant 6 : index
    %c0_137 = arith.constant 0 : index
    %c0_138 = arith.constant 0 : index
    %160 = vector.load %arg6[%c0_135, %c6_136, %c0_137, %c0_138] : memref<1x10x8x128xf32, #tpu.memory_space<vmem>>, vector<1x1x8x128xf32>
    %161 = vector.shape_cast %160 : vector<1x1x8x128xf32> to vector<8x128xf32>
    %cst_139 = arith.constant 0.000000e+00 : f32
    %162 = vector.broadcast %cst_139 : f32 to vector<1x8x128xf32>
    %163 = arith.select %150, %28, %162 : vector<1x8x128xi1>, vector<1x8x128xf32>
    %cst_140 = arith.constant dense<0.000000e+00> : vector<8x128xf32>
    %164 = vector.multi_reduction <add>, %163, %cst_140 [0] : vector<1x8x128xf32> to vector<8x128xf32>
    %165 = arith.addf %161, %164 : vector<8x128xf32>
    %c0_141 = arith.constant 0 : index
    %c6_142 = arith.constant 6 : index
    %c0_143 = arith.constant 0 : index
    %c0_144 = arith.constant 0 : index
    %166 = vector.load %arg6[%c0_141, %c6_142, %c0_143, %c0_144] : memref<1x10x8x128xf32, #tpu.memory_space<vmem>>, vector<1x1x8x128xf32>
    %167 = vector.shape_cast %166 : vector<1x1x8x128xf32> to vector<8x128xf32>
    %168 = vector.shape_cast %165 : vector<8x128xf32> to vector<1x1x8x128xf32>
    tpu.vector_store %arg6[%c0_141, %c6_142, %c0_143, %c0_144], %168 {strides = array<i32>} : memref<1x10x8x128xf32, #tpu.memory_space<vmem>>, vector<1x1x8x128xf32>,
    %cst_145 = arith.constant 7.000000e+00 : f32
    %169 = vector.broadcast %cst_145 : f32 to vector<1x8x128xf32>
    %170 = arith.cmpf oeq, %26, %169 : vector<1x8x128xf32>
    %c0_146 = arith.constant 0 : index
    %c7 = arith.constant 7 : index
    %c0_147 = arith.constant 0 : index
    %c0_148 = arith.constant 0 : index
    %171 = vector.load %arg5[%c0_146, %c7, %c0_147, %c0_148] : memref<1x10x8x128xf32, #tpu.memory_space<vmem>>, vector<1x1x8x128xf32>
    %172 = vector.shape_cast %171 : vector<1x1x8x128xf32> to vector<8x128xf32>
    %173 = arith.extui %170 : vector<1x8x128xi1> to vector<1x8x128xi32>
    %174 = arith.sitofp %173 : vector<1x8x128xi32> to vector<1x8x128xf32>
    %cst_149 = arith.constant dense<0.000000e+00> : vector<8x128xf32>
    %175 = vector.multi_reduction <add>, %174, %cst_149 [0] : vector<1x8x128xf32> to vector<8x128xf32>
    %176 = arith.addf %172, %175 : vector<8x128xf32>
    %c0_150 = arith.constant 0 : index
    %c7_151 = arith.constant 7 : index
    %c0_152 = arith.constant 0 : index
    %c0_153 = arith.constant 0 : index
    %177 = vector.load %arg5[%c0_150, %c7_151, %c0_152, %c0_153] : memref<1x10x8x128xf32, #tpu.memory_space<vmem>>, vector<1x1x8x128xf32>
    %178 = vector.shape_cast %177 : vector<1x1x8x128xf32> to vector<8x128xf32>
    %179 = vector.shape_cast %176 : vector<8x128xf32> to vector<1x1x8x128xf32>
    tpu.vector_store %arg5[%c0_150, %c7_151, %c0_152, %c0_153], %179 {strides = array<i32>} : memref<1x10x8x128xf32, #tpu.memory_space<vmem>>, vector<1x1x8x128xf32>,
    %c0_154 = arith.constant 0 : index
    %c7_155 = arith.constant 7 : index
    %c0_156 = arith.constant 0 : index
    %c0_157 = arith.constant 0 : index
    %180 = vector.load %arg6[%c0_154, %c7_155, %c0_156, %c0_157] : memref<1x10x8x128xf32, #tpu.memory_space<vmem>>, vector<1x1x8x128xf32>
    %181 = vector.shape_cast %180 : vector<1x1x8x128xf32> to vector<8x128xf32>
    %cst_158 = arith.constant 0.000000e+00 : f32
    %182 = vector.broadcast %cst_158 : f32 to vector<1x8x128xf32>
    %183 = arith.select %170, %28, %182 : vector<1x8x128xi1>, vector<1x8x128xf32>
    %cst_159 = arith.constant dense<0.000000e+00> : vector<8x128xf32>
    %184 = vector.multi_reduction <add>, %183, %cst_159 [0] : vector<1x8x128xf32> to vector<8x128xf32>
    %185 = arith.addf %181, %184 : vector<8x128xf32>
    %c0_160 = arith.constant 0 : index
    %c7_161 = arith.constant 7 : index
    %c0_162 = arith.constant 0 : index
    %c0_163 = arith.constant 0 : index
    %186 = vector.load %arg6[%c0_160, %c7_161, %c0_162, %c0_163] : memref<1x10x8x128xf32, #tpu.memory_space<vmem>>, vector<1x1x8x128xf32>
    %187 = vector.shape_cast %186 : vector<1x1x8x128xf32> to vector<8x128xf32>
    %188 = vector.shape_cast %185 : vector<8x128xf32> to vector<1x1x8x128xf32>
    tpu.vector_store %arg6[%c0_160, %c7_161, %c0_162, %c0_163], %188 {strides = array<i32>} : memref<1x10x8x128xf32, #tpu.memory_space<vmem>>, vector<1x1x8x128xf32>,
    %cst_164 = arith.constant 8.000000e+00 : f32
    %189 = vector.broadcast %cst_164 : f32 to vector<1x8x128xf32>
    %190 = arith.cmpf oeq, %26, %189 : vector<1x8x128xf32>
    %c0_165 = arith.constant 0 : index
    %c8 = arith.constant 8 : index
    %c0_166 = arith.constant 0 : index
    %c0_167 = arith.constant 0 : index
    %191 = vector.load %arg5[%c0_165, %c8, %c0_166, %c0_167] : memref<1x10x8x128xf32, #tpu.memory_space<vmem>>, vector<1x1x8x128xf32>
    %192 = vector.shape_cast %191 : vector<1x1x8x128xf32> to vector<8x128xf32>
    %193 = arith.extui %190 : vector<1x8x128xi1> to vector<1x8x128xi32>
    %194 = arith.sitofp %193 : vector<1x8x128xi32> to vector<1x8x128xf32>
    %cst_168 = arith.constant dense<0.000000e+00> : vector<8x128xf32>
    %195 = vector.multi_reduction <add>, %194, %cst_168 [0] : vector<1x8x128xf32> to vector<8x128xf32>
    %196 = arith.addf %192, %195 : vector<8x128xf32>
    %c0_169 = arith.constant 0 : index
    %c8_170 = arith.constant 8 : index
    %c0_171 = arith.constant 0 : index
    %c0_172 = arith.constant 0 : index
    %197 = vector.load %arg5[%c0_169, %c8_170, %c0_171, %c0_172] : memref<1x10x8x128xf32, #tpu.memory_space<vmem>>, vector<1x1x8x128xf32>
    %198 = vector.shape_cast %197 : vector<1x1x8x128xf32> to vector<8x128xf32>
    %199 = vector.shape_cast %196 : vector<8x128xf32> to vector<1x1x8x128xf32>
    tpu.vector_store %arg5[%c0_169, %c8_170, %c0_171, %c0_172], %199 {strides = array<i32>} : memref<1x10x8x128xf32, #tpu.memory_space<vmem>>, vector<1x1x8x128xf32>,
    %c0_173 = arith.constant 0 : index
    %c8_174 = arith.constant 8 : index
    %c0_175 = arith.constant 0 : index
    %c0_176 = arith.constant 0 : index
    %200 = vector.load %arg6[%c0_173, %c8_174, %c0_175, %c0_176] : memref<1x10x8x128xf32, #tpu.memory_space<vmem>>, vector<1x1x8x128xf32>
    %201 = vector.shape_cast %200 : vector<1x1x8x128xf32> to vector<8x128xf32>
    %cst_177 = arith.constant 0.000000e+00 : f32
    %202 = vector.broadcast %cst_177 : f32 to vector<1x8x128xf32>
    %203 = arith.select %190, %28, %202 : vector<1x8x128xi1>, vector<1x8x128xf32>
    %cst_178 = arith.constant dense<0.000000e+00> : vector<8x128xf32>
    %204 = vector.multi_reduction <add>, %203, %cst_178 [0] : vector<1x8x128xf32> to vector<8x128xf32>
    %205 = arith.addf %201, %204 : vector<8x128xf32>
    %c0_179 = arith.constant 0 : index
    %c8_180 = arith.constant 8 : index
    %c0_181 = arith.constant 0 : index
    %c0_182 = arith.constant 0 : index
    %206 = vector.load %arg6[%c0_179, %c8_180, %c0_181, %c0_182] : memref<1x10x8x128xf32, #tpu.memory_space<vmem>>, vector<1x1x8x128xf32>
    %207 = vector.shape_cast %206 : vector<1x1x8x128xf32> to vector<8x128xf32>
    %208 = vector.shape_cast %205 : vector<8x128xf32> to vector<1x1x8x128xf32>
    tpu.vector_store %arg6[%c0_179, %c8_180, %c0_181, %c0_182], %208 {strides = array<i32>} : memref<1x10x8x128xf32, #tpu.memory_space<vmem>>, vector<1x1x8x128xf32>,
    %cst_183 = arith.constant 9.000000e+00 : f32
    %209 = vector.broadcast %cst_183 : f32 to vector<1x8x128xf32>
    %210 = arith.cmpf oeq, %26, %209 : vector<1x8x128xf32>
    %c0_184 = arith.constant 0 : index
    %c9 = arith.constant 9 : index
    %c0_185 = arith.constant 0 : index
    %c0_186 = arith.constant 0 : index
    %211 = vector.load %arg5[%c0_184, %c9, %c0_185, %c0_186] : memref<1x10x8x128xf32, #tpu.memory_space<vmem>>, vector<1x1x8x128xf32>
    %212 = vector.shape_cast %211 : vector<1x1x8x128xf32> to vector<8x128xf32>
    %213 = arith.extui %210 : vector<1x8x128xi1> to vector<1x8x128xi32>
    %214 = arith.sitofp %213 : vector<1x8x128xi32> to vector<1x8x128xf32>
    %cst_187 = arith.constant dense<0.000000e+00> : vector<8x128xf32>
    %215 = vector.multi_reduction <add>, %214, %cst_187 [0] : vector<1x8x128xf32> to vector<8x128xf32>
    %216 = arith.addf %212, %215 : vector<8x128xf32>
    %c0_188 = arith.constant 0 : index
    %c9_189 = arith.constant 9 : index
    %c0_190 = arith.constant 0 : index
    %c0_191 = arith.constant 0 : index
    %217 = vector.load %arg5[%c0_188, %c9_189, %c0_190, %c0_191] : memref<1x10x8x128xf32, #tpu.memory_space<vmem>>, vector<1x1x8x128xf32>
    %218 = vector.shape_cast %217 : vector<1x1x8x128xf32> to vector<8x128xf32>
    %219 = vector.shape_cast %216 : vector<8x128xf32> to vector<1x1x8x128xf32>
    tpu.vector_store %arg5[%c0_188, %c9_189, %c0_190, %c0_191], %219 {strides = array<i32>} : memref<1x10x8x128xf32, #tpu.memory_space<vmem>>, vector<1x1x8x128xf32>,
    %c0_192 = arith.constant 0 : index
    %c9_193 = arith.constant 9 : index
    %c0_194 = arith.constant 0 : index
    %c0_195 = arith.constant 0 : index
    %220 = vector.load %arg6[%c0_192, %c9_193, %c0_194, %c0_195] : memref<1x10x8x128xf32, #tpu.memory_space<vmem>>, vector<1x1x8x128xf32>
    %221 = vector.shape_cast %220 : vector<1x1x8x128xf32> to vector<8x128xf32>
    %cst_196 = arith.constant 0.000000e+00 : f32
    %222 = vector.broadcast %cst_196 : f32 to vector<1x8x128xf32>
    %223 = arith.select %210, %28, %222 : vector<1x8x128xi1>, vector<1x8x128xf32>
    %cst_197 = arith.constant dense<0.000000e+00> : vector<8x128xf32>
    %224 = vector.multi_reduction <add>, %223, %cst_197 [0] : vector<1x8x128xf32> to vector<8x128xf32>
    %225 = arith.addf %221, %224 : vector<8x128xf32>
    %c0_198 = arith.constant 0 : index
    %c9_199 = arith.constant 9 : index
    %c0_200 = arith.constant 0 : index
    %c0_201 = arith.constant 0 : index
    %226 = vector.load %arg6[%c0_198, %c9_199, %c0_200, %c0_201] : memref<1x10x8x128xf32, #tpu.memory_space<vmem>>, vector<1x1x8x128xf32>
    %227 = vector.shape_cast %226 : vector<1x1x8x128xf32> to vector<8x128xf32>
    %228 = vector.shape_cast %225 : vector<8x128xf32> to vector<1x1x8x128xf32>
    tpu.vector_store %arg6[%c0_198, %c9_199, %c0_200, %c0_201], %228 {strides = array<i32>} : memref<1x10x8x128xf32, #tpu.memory_space<vmem>>, vector<1x1x8x128xf32>,
    %229 = vector.extract_strided_slice %24 {offsets = [8, 0], sizes = [2, 128], strides = [1, 1]} : vector<10x128xf32> to vector<2x128xf32>
    %230 = vector.extract_strided_slice %13 {offsets = [8, 0], sizes = [2, 128], strides = [1, 1]} : vector<10x128xf32> to vector<2x128xf32>
    %cst_202 = arith.constant 0.000000e+00 : f32
    %231 = vector.broadcast %cst_202 : f32 to vector<2x128xf32>
    %232 = arith.cmpf oeq, %229, %231 : vector<2x128xf32>
    %c0_203 = arith.constant 0 : index
    %c0_204 = arith.constant 0 : index
    %c0_205 = arith.constant 0 : index
    %c0_206 = arith.constant 0 : index
    %233 = vector.load %arg5[%c0_203, %c0_204, %c0_205, %c0_206] : memref<1x10x8x128xf32, #tpu.memory_space<vmem>>, vector<1x1x1x128xf32>
    %234 = vector.shape_cast %233 : vector<1x1x1x128xf32> to vector<1x128xf32>
    %235 = arith.extui %232 : vector<2x128xi1> to vector<2x128xi32>
    %236 = arith.sitofp %235 : vector<2x128xi32> to vector<2x128xf32>
    %cst_207 = arith.constant dense<0.000000e+00> : vector<128xf32>
    %237 = vector.multi_reduction <add>, %236, %cst_207 [0] : vector<2x128xf32> to vector<128xf32>
    %238 = vector.shape_cast %237 : vector<128xf32> to vector<1x128xf32>
    %239 = arith.addf %234, %238 : vector<1x128xf32>
    %c0_208 = arith.constant 0 : index
    %c0_209 = arith.constant 0 : index
    %c0_210 = arith.constant 0 : index
    %c0_211 = arith.constant 0 : index
    %240 = vector.load %arg5[%c0_208, %c0_209, %c0_210, %c0_211] : memref<1x10x8x128xf32, #tpu.memory_space<vmem>>, vector<1x1x1x128xf32>
    %241 = vector.shape_cast %240 : vector<1x1x1x128xf32> to vector<1x128xf32>
    %242 = vector.shape_cast %239 : vector<1x128xf32> to vector<1x1x1x128xf32>
    tpu.vector_store %arg5[%c0_208, %c0_209, %c0_210, %c0_211], %242 {strides = array<i32>} : memref<1x10x8x128xf32, #tpu.memory_space<vmem>>, vector<1x1x1x128xf32>,
    %c0_212 = arith.constant 0 : index
    %c0_213 = arith.constant 0 : index
    %c0_214 = arith.constant 0 : index
    %c0_215 = arith.constant 0 : index
    %243 = vector.load %arg6[%c0_212, %c0_213, %c0_214, %c0_215] : memref<1x10x8x128xf32, #tpu.memory_space<vmem>>, vector<1x1x1x128xf32>
    %244 = vector.shape_cast %243 : vector<1x1x1x128xf32> to vector<1x128xf32>
    %cst_216 = arith.constant 0.000000e+00 : f32
    %245 = vector.broadcast %cst_216 : f32 to vector<2x128xf32>
    %246 = arith.select %232, %230, %245 : vector<2x128xi1>, vector<2x128xf32>
    %cst_217 = arith.constant dense<0.000000e+00> : vector<128xf32>
    %247 = vector.multi_reduction <add>, %246, %cst_217 [0] : vector<2x128xf32> to vector<128xf32>
    %248 = vector.shape_cast %247 : vector<128xf32> to vector<1x128xf32>
    %249 = arith.addf %244, %248 : vector<1x128xf32>
    %c0_218 = arith.constant 0 : index
    %c0_219 = arith.constant 0 : index
    %c0_220 = arith.constant 0 : index
    %c0_221 = arith.constant 0 : index
    %250 = vector.load %arg6[%c0_218, %c0_219, %c0_220, %c0_221] : memref<1x10x8x128xf32, #tpu.memory_space<vmem>>, vector<1x1x1x128xf32>
    %251 = vector.shape_cast %250 : vector<1x1x1x128xf32> to vector<1x128xf32>
    %252 = vector.shape_cast %249 : vector<1x128xf32> to vector<1x1x1x128xf32>
    tpu.vector_store %arg6[%c0_218, %c0_219, %c0_220, %c0_221], %252 {strides = array<i32>} : memref<1x10x8x128xf32, #tpu.memory_space<vmem>>, vector<1x1x1x128xf32>,
    %cst_222 = arith.constant 1.000000e+00 : f32
    %253 = vector.broadcast %cst_222 : f32 to vector<2x128xf32>
    %254 = arith.cmpf oeq, %229, %253 : vector<2x128xf32>
    %c0_223 = arith.constant 0 : index
    %c1_224 = arith.constant 1 : index
    %c0_225 = arith.constant 0 : index
    %c0_226 = arith.constant 0 : index
    %255 = vector.load %arg5[%c0_223, %c1_224, %c0_225, %c0_226] : memref<1x10x8x128xf32, #tpu.memory_space<vmem>>, vector<1x1x1x128xf32>
    %256 = vector.shape_cast %255 : vector<1x1x1x128xf32> to vector<1x128xf32>
    %257 = arith.extui %254 : vector<2x128xi1> to vector<2x128xi32>
    %258 = arith.sitofp %257 : vector<2x128xi32> to vector<2x128xf32>
    %cst_227 = arith.constant dense<0.000000e+00> : vector<128xf32>
    %259 = vector.multi_reduction <add>, %258, %cst_227 [0] : vector<2x128xf32> to vector<128xf32>
    %260 = vector.shape_cast %259 : vector<128xf32> to vector<1x128xf32>
    %261 = arith.addf %256, %260 : vector<1x128xf32>
    %c0_228 = arith.constant 0 : index
    %c1_229 = arith.constant 1 : index
    %c0_230 = arith.constant 0 : index
    %c0_231 = arith.constant 0 : index
    %262 = vector.load %arg5[%c0_228, %c1_229, %c0_230, %c0_231] : memref<1x10x8x128xf32, #tpu.memory_space<vmem>>, vector<1x1x1x128xf32>
    %263 = vector.shape_cast %262 : vector<1x1x1x128xf32> to vector<1x128xf32>
    %264 = vector.shape_cast %261 : vector<1x128xf32> to vector<1x1x1x128xf32>
    tpu.vector_store %arg5[%c0_228, %c1_229, %c0_230, %c0_231], %264 {strides = array<i32>} : memref<1x10x8x128xf32, #tpu.memory_space<vmem>>, vector<1x1x1x128xf32>,
    %c0_232 = arith.constant 0 : index
    %c1_233 = arith.constant 1 : index
    %c0_234 = arith.constant 0 : index
    %c0_235 = arith.constant 0 : index
    %265 = vector.load %arg6[%c0_232, %c1_233, %c0_234, %c0_235] : memref<1x10x8x128xf32, #tpu.memory_space<vmem>>, vector<1x1x1x128xf32>
    %266 = vector.shape_cast %265 : vector<1x1x1x128xf32> to vector<1x128xf32>
    %cst_236 = arith.constant 0.000000e+00 : f32
    %267 = vector.broadcast %cst_236 : f32 to vector<2x128xf32>
    %268 = arith.select %254, %230, %267 : vector<2x128xi1>, vector<2x128xf32>
    %cst_237 = arith.constant dense<0.000000e+00> : vector<128xf32>
    %269 = vector.multi_reduction <add>, %268, %cst_237 [0] : vector<2x128xf32> to vector<128xf32>
    %270 = vector.shape_cast %269 : vector<128xf32> to vector<1x128xf32>
    %271 = arith.addf %266, %270 : vector<1x128xf32>
    %c0_238 = arith.constant 0 : index
    %c1_239 = arith.constant 1 : index
    %c0_240 = arith.constant 0 : index
    %c0_241 = arith.constant 0 : index
    %272 = vector.load %arg6[%c0_238, %c1_239, %c0_240, %c0_241] : memref<1x10x8x128xf32, #tpu.memory_space<vmem>>, vector<1x1x1x128xf32>
    %273 = vector.shape_cast %272 : vector<1x1x1x128xf32> to vector<1x128xf32>
    %274 = vector.shape_cast %271 : vector<1x128xf32> to vector<1x1x1x128xf32>
    tpu.vector_store %arg6[%c0_238, %c1_239, %c0_240, %c0_241], %274 {strides = array<i32>} : memref<1x10x8x128xf32, #tpu.memory_space<vmem>>, vector<1x1x1x128xf32>,
    %cst_242 = arith.constant 2.000000e+00 : f32
    %275 = vector.broadcast %cst_242 : f32 to vector<2x128xf32>
    %276 = arith.cmpf oeq, %229, %275 : vector<2x128xf32>
    %c0_243 = arith.constant 0 : index
    %c2_244 = arith.constant 2 : index
    %c0_245 = arith.constant 0 : index
    %c0_246 = arith.constant 0 : index
    %277 = vector.load %arg5[%c0_243, %c2_244, %c0_245, %c0_246] : memref<1x10x8x128xf32, #tpu.memory_space<vmem>>, vector<1x1x1x128xf32>
    %278 = vector.shape_cast %277 : vector<1x1x1x128xf32> to vector<1x128xf32>
    %279 = arith.extui %276 : vector<2x128xi1> to vector<2x128xi32>
    %280 = arith.sitofp %279 : vector<2x128xi32> to vector<2x128xf32>
    %cst_247 = arith.constant dense<0.000000e+00> : vector<128xf32>
    %281 = vector.multi_reduction <add>, %280, %cst_247 [0] : vector<2x128xf32> to vector<128xf32>
    %282 = vector.shape_cast %281 : vector<128xf32> to vector<1x128xf32>
    %283 = arith.addf %278, %282 : vector<1x128xf32>
    %c0_248 = arith.constant 0 : index
    %c2_249 = arith.constant 2 : index
    %c0_250 = arith.constant 0 : index
    %c0_251 = arith.constant 0 : index
    %284 = vector.load %arg5[%c0_248, %c2_249, %c0_250, %c0_251] : memref<1x10x8x128xf32, #tpu.memory_space<vmem>>, vector<1x1x1x128xf32>
    %285 = vector.shape_cast %284 : vector<1x1x1x128xf32> to vector<1x128xf32>
    %286 = vector.shape_cast %283 : vector<1x128xf32> to vector<1x1x1x128xf32>
    tpu.vector_store %arg5[%c0_248, %c2_249, %c0_250, %c0_251], %286 {strides = array<i32>} : memref<1x10x8x128xf32, #tpu.memory_space<vmem>>, vector<1x1x1x128xf32>,
    %c0_252 = arith.constant 0 : index
    %c2_253 = arith.constant 2 : index
    %c0_254 = arith.constant 0 : index
    %c0_255 = arith.constant 0 : index
    %287 = vector.load %arg6[%c0_252, %c2_253, %c0_254, %c0_255] : memref<1x10x8x128xf32, #tpu.memory_space<vmem>>, vector<1x1x1x128xf32>
    %288 = vector.shape_cast %287 : vector<1x1x1x128xf32> to vector<1x128xf32>
    %cst_256 = arith.constant 0.000000e+00 : f32
    %289 = vector.broadcast %cst_256 : f32 to vector<2x128xf32>
    %290 = arith.select %276, %230, %289 : vector<2x128xi1>, vector<2x128xf32>
    %cst_257 = arith.constant dense<0.000000e+00> : vector<128xf32>
    %291 = vector.multi_reduction <add>, %290, %cst_257 [0] : vector<2x128xf32> to vector<128xf32>
    %292 = vector.shape_cast %291 : vector<128xf32> to vector<1x128xf32>
    %293 = arith.addf %288, %292 : vector<1x128xf32>
    %c0_258 = arith.constant 0 : index
    %c2_259 = arith.constant 2 : index
    %c0_260 = arith.constant 0 : index
    %c0_261 = arith.constant 0 : index
    %294 = vector.load %arg6[%c0_258, %c2_259, %c0_260, %c0_261] : memref<1x10x8x128xf32, #tpu.memory_space<vmem>>, vector<1x1x1x128xf32>
    %295 = vector.shape_cast %294 : vector<1x1x1x128xf32> to vector<1x128xf32>
    %296 = vector.shape_cast %293 : vector<1x128xf32> to vector<1x1x1x128xf32>
    tpu.vector_store %arg6[%c0_258, %c2_259, %c0_260, %c0_261], %296 {strides = array<i32>} : memref<1x10x8x128xf32, #tpu.memory_space<vmem>>, vector<1x1x1x128xf32>,
    %cst_262 = arith.constant 3.000000e+00 : f32
    %297 = vector.broadcast %cst_262 : f32 to vector<2x128xf32>
    %298 = arith.cmpf oeq, %229, %297 : vector<2x128xf32>
    %c0_263 = arith.constant 0 : index
    %c3_264 = arith.constant 3 : index
    %c0_265 = arith.constant 0 : index
    %c0_266 = arith.constant 0 : index
    %299 = vector.load %arg5[%c0_263, %c3_264, %c0_265, %c0_266] : memref<1x10x8x128xf32, #tpu.memory_space<vmem>>, vector<1x1x1x128xf32>
    %300 = vector.shape_cast %299 : vector<1x1x1x128xf32> to vector<1x128xf32>
    %301 = arith.extui %298 : vector<2x128xi1> to vector<2x128xi32>
    %302 = arith.sitofp %301 : vector<2x128xi32> to vector<2x128xf32>
    %cst_267 = arith.constant dense<0.000000e+00> : vector<128xf32>
    %303 = vector.multi_reduction <add>, %302, %cst_267 [0] : vector<2x128xf32> to vector<128xf32>
    %304 = vector.shape_cast %303 : vector<128xf32> to vector<1x128xf32>
    %305 = arith.addf %300, %304 : vector<1x128xf32>
    %c0_268 = arith.constant 0 : index
    %c3_269 = arith.constant 3 : index
    %c0_270 = arith.constant 0 : index
    %c0_271 = arith.constant 0 : index
    %306 = vector.load %arg5[%c0_268, %c3_269, %c0_270, %c0_271] : memref<1x10x8x128xf32, #tpu.memory_space<vmem>>, vector<1x1x1x128xf32>
    %307 = vector.shape_cast %306 : vector<1x1x1x128xf32> to vector<1x128xf32>
    %308 = vector.shape_cast %305 : vector<1x128xf32> to vector<1x1x1x128xf32>
    tpu.vector_store %arg5[%c0_268, %c3_269, %c0_270, %c0_271], %308 {strides = array<i32>} : memref<1x10x8x128xf32, #tpu.memory_space<vmem>>, vector<1x1x1x128xf32>,
    %c0_272 = arith.constant 0 : index
    %c3_273 = arith.constant 3 : index
    %c0_274 = arith.constant 0 : index
    %c0_275 = arith.constant 0 : index
    %309 = vector.load %arg6[%c0_272, %c3_273, %c0_274, %c0_275] : memref<1x10x8x128xf32, #tpu.memory_space<vmem>>, vector<1x1x1x128xf32>
    %310 = vector.shape_cast %309 : vector<1x1x1x128xf32> to vector<1x128xf32>
    %cst_276 = arith.constant 0.000000e+00 : f32
    %311 = vector.broadcast %cst_276 : f32 to vector<2x128xf32>
    %312 = arith.select %298, %230, %311 : vector<2x128xi1>, vector<2x128xf32>
    %cst_277 = arith.constant dense<0.000000e+00> : vector<128xf32>
    %313 = vector.multi_reduction <add>, %312, %cst_277 [0] : vector<2x128xf32> to vector<128xf32>
    %314 = vector.shape_cast %313 : vector<128xf32> to vector<1x128xf32>
    %315 = arith.addf %310, %314 : vector<1x128xf32>
    %c0_278 = arith.constant 0 : index
    %c3_279 = arith.constant 3 : index
    %c0_280 = arith.constant 0 : index
    %c0_281 = arith.constant 0 : index
    %316 = vector.load %arg6[%c0_278, %c3_279, %c0_280, %c0_281] : memref<1x10x8x128xf32, #tpu.memory_space<vmem>>, vector<1x1x1x128xf32>
    %317 = vector.shape_cast %316 : vector<1x1x1x128xf32> to vector<1x128xf32>
    %318 = vector.shape_cast %315 : vector<1x128xf32> to vector<1x1x1x128xf32>
    tpu.vector_store %arg6[%c0_278, %c3_279, %c0_280, %c0_281], %318 {strides = array<i32>} : memref<1x10x8x128xf32, #tpu.memory_space<vmem>>, vector<1x1x1x128xf32>,
    %cst_282 = arith.constant 4.000000e+00 : f32
    %319 = vector.broadcast %cst_282 : f32 to vector<2x128xf32>
    %320 = arith.cmpf oeq, %229, %319 : vector<2x128xf32>
    %c0_283 = arith.constant 0 : index
    %c4_284 = arith.constant 4 : index
    %c0_285 = arith.constant 0 : index
    %c0_286 = arith.constant 0 : index
    %321 = vector.load %arg5[%c0_283, %c4_284, %c0_285, %c0_286] : memref<1x10x8x128xf32, #tpu.memory_space<vmem>>, vector<1x1x1x128xf32>
    %322 = vector.shape_cast %321 : vector<1x1x1x128xf32> to vector<1x128xf32>
    %323 = arith.extui %320 : vector<2x128xi1> to vector<2x128xi32>
    %324 = arith.sitofp %323 : vector<2x128xi32> to vector<2x128xf32>
    %cst_287 = arith.constant dense<0.000000e+00> : vector<128xf32>
    %325 = vector.multi_reduction <add>, %324, %cst_287 [0] : vector<2x128xf32> to vector<128xf32>
    %326 = vector.shape_cast %325 : vector<128xf32> to vector<1x128xf32>
    %327 = arith.addf %322, %326 : vector<1x128xf32>
    %c0_288 = arith.constant 0 : index
    %c4_289 = arith.constant 4 : index
    %c0_290 = arith.constant 0 : index
    %c0_291 = arith.constant 0 : index
    %328 = vector.load %arg5[%c0_288, %c4_289, %c0_290, %c0_291] : memref<1x10x8x128xf32, #tpu.memory_space<vmem>>, vector<1x1x1x128xf32>
    %329 = vector.shape_cast %328 : vector<1x1x1x128xf32> to vector<1x128xf32>
    %330 = vector.shape_cast %327 : vector<1x128xf32> to vector<1x1x1x128xf32>
    tpu.vector_store %arg5[%c0_288, %c4_289, %c0_290, %c0_291], %330 {strides = array<i32>} : memref<1x10x8x128xf32, #tpu.memory_space<vmem>>, vector<1x1x1x128xf32>,
    %c0_292 = arith.constant 0 : index
    %c4_293 = arith.constant 4 : index
    %c0_294 = arith.constant 0 : index
    %c0_295 = arith.constant 0 : index
    %331 = vector.load %arg6[%c0_292, %c4_293, %c0_294, %c0_295] : memref<1x10x8x128xf32, #tpu.memory_space<vmem>>, vector<1x1x1x128xf32>
    %332 = vector.shape_cast %331 : vector<1x1x1x128xf32> to vector<1x128xf32>
    %cst_296 = arith.constant 0.000000e+00 : f32
    %333 = vector.broadcast %cst_296 : f32 to vector<2x128xf32>
    %334 = arith.select %320, %230, %333 : vector<2x128xi1>, vector<2x128xf32>
    %cst_297 = arith.constant dense<0.000000e+00> : vector<128xf32>
    %335 = vector.multi_reduction <add>, %334, %cst_297 [0] : vector<2x128xf32> to vector<128xf32>
    %336 = vector.shape_cast %335 : vector<128xf32> to vector<1x128xf32>
    %337 = arith.addf %332, %336 : vector<1x128xf32>
    %c0_298 = arith.constant 0 : index
    %c4_299 = arith.constant 4 : index
    %c0_300 = arith.constant 0 : index
    %c0_301 = arith.constant 0 : index
    %338 = vector.load %arg6[%c0_298, %c4_299, %c0_300, %c0_301] : memref<1x10x8x128xf32, #tpu.memory_space<vmem>>, vector<1x1x1x128xf32>
    %339 = vector.shape_cast %338 : vector<1x1x1x128xf32> to vector<1x128xf32>
    %340 = vector.shape_cast %337 : vector<1x128xf32> to vector<1x1x1x128xf32>
    tpu.vector_store %arg6[%c0_298, %c4_299, %c0_300, %c0_301], %340 {strides = array<i32>} : memref<1x10x8x128xf32, #tpu.memory_space<vmem>>, vector<1x1x1x128xf32>,
    %cst_302 = arith.constant 5.000000e+00 : f32
    %341 = vector.broadcast %cst_302 : f32 to vector<2x128xf32>
    %342 = arith.cmpf oeq, %229, %341 : vector<2x128xf32>
    %c0_303 = arith.constant 0 : index
    %c5_304 = arith.constant 5 : index
    %c0_305 = arith.constant 0 : index
    %c0_306 = arith.constant 0 : index
    %343 = vector.load %arg5[%c0_303, %c5_304, %c0_305, %c0_306] : memref<1x10x8x128xf32, #tpu.memory_space<vmem>>, vector<1x1x1x128xf32>
    %344 = vector.shape_cast %343 : vector<1x1x1x128xf32> to vector<1x128xf32>
    %345 = arith.extui %342 : vector<2x128xi1> to vector<2x128xi32>
    %346 = arith.sitofp %345 : vector<2x128xi32> to vector<2x128xf32>
    %cst_307 = arith.constant dense<0.000000e+00> : vector<128xf32>
    %347 = vector.multi_reduction <add>, %346, %cst_307 [0] : vector<2x128xf32> to vector<128xf32>
    %348 = vector.shape_cast %347 : vector<128xf32> to vector<1x128xf32>
    %349 = arith.addf %344, %348 : vector<1x128xf32>
    %c0_308 = arith.constant 0 : index
    %c5_309 = arith.constant 5 : index
    %c0_310 = arith.constant 0 : index
    %c0_311 = arith.constant 0 : index
    %350 = vector.load %arg5[%c0_308, %c5_309, %c0_310, %c0_311] : memref<1x10x8x128xf32, #tpu.memory_space<vmem>>, vector<1x1x1x128xf32>
    %351 = vector.shape_cast %350 : vector<1x1x1x128xf32> to vector<1x128xf32>
    %352 = vector.shape_cast %349 : vector<1x128xf32> to vector<1x1x1x128xf32>
    tpu.vector_store %arg5[%c0_308, %c5_309, %c0_310, %c0_311], %352 {strides = array<i32>} : memref<1x10x8x128xf32, #tpu.memory_space<vmem>>, vector<1x1x1x128xf32>,
    %c0_312 = arith.constant 0 : index
    %c5_313 = arith.constant 5 : index
    %c0_314 = arith.constant 0 : index
    %c0_315 = arith.constant 0 : index
    %353 = vector.load %arg6[%c0_312, %c5_313, %c0_314, %c0_315] : memref<1x10x8x128xf32, #tpu.memory_space<vmem>>, vector<1x1x1x128xf32>
    %354 = vector.shape_cast %353 : vector<1x1x1x128xf32> to vector<1x128xf32>
    %cst_316 = arith.constant 0.000000e+00 : f32
    %355 = vector.broadcast %cst_316 : f32 to vector<2x128xf32>
    %356 = arith.select %342, %230, %355 : vector<2x128xi1>, vector<2x128xf32>
    %cst_317 = arith.constant dense<0.000000e+00> : vector<128xf32>
    %357 = vector.multi_reduction <add>, %356, %cst_317 [0] : vector<2x128xf32> to vector<128xf32>
    %358 = vector.shape_cast %357 : vector<128xf32> to vector<1x128xf32>
    %359 = arith.addf %354, %358 : vector<1x128xf32>
    %c0_318 = arith.constant 0 : index
    %c5_319 = arith.constant 5 : index
    %c0_320 = arith.constant 0 : index
    %c0_321 = arith.constant 0 : index
    %360 = vector.load %arg6[%c0_318, %c5_319, %c0_320, %c0_321] : memref<1x10x8x128xf32, #tpu.memory_space<vmem>>, vector<1x1x1x128xf32>
    %361 = vector.shape_cast %360 : vector<1x1x1x128xf32> to vector<1x128xf32>
    %362 = vector.shape_cast %359 : vector<1x128xf32> to vector<1x1x1x128xf32>
    tpu.vector_store %arg6[%c0_318, %c5_319, %c0_320, %c0_321], %362 {strides = array<i32>} : memref<1x10x8x128xf32, #tpu.memory_space<vmem>>, vector<1x1x1x128xf32>,
    %cst_322 = arith.constant 6.000000e+00 : f32
    %363 = vector.broadcast %cst_322 : f32 to vector<2x128xf32>
    %364 = arith.cmpf oeq, %229, %363 : vector<2x128xf32>
    %c0_323 = arith.constant 0 : index
    %c6_324 = arith.constant 6 : index
    %c0_325 = arith.constant 0 : index
    %c0_326 = arith.constant 0 : index
    %365 = vector.load %arg5[%c0_323, %c6_324, %c0_325, %c0_326] : memref<1x10x8x128xf32, #tpu.memory_space<vmem>>, vector<1x1x1x128xf32>
    %366 = vector.shape_cast %365 : vector<1x1x1x128xf32> to vector<1x128xf32>
    %367 = arith.extui %364 : vector<2x128xi1> to vector<2x128xi32>
    %368 = arith.sitofp %367 : vector<2x128xi32> to vector<2x128xf32>
    %cst_327 = arith.constant dense<0.000000e+00> : vector<128xf32>
    %369 = vector.multi_reduction <add>, %368, %cst_327 [0] : vector<2x128xf32> to vector<128xf32>
    %370 = vector.shape_cast %369 : vector<128xf32> to vector<1x128xf32>
    %371 = arith.addf %366, %370 : vector<1x128xf32>
    %c0_328 = arith.constant 0 : index
    %c6_329 = arith.constant 6 : index
    %c0_330 = arith.constant 0 : index
    %c0_331 = arith.constant 0 : index
    %372 = vector.load %arg5[%c0_328, %c6_329, %c0_330, %c0_331] : memref<1x10x8x128xf32, #tpu.memory_space<vmem>>, vector<1x1x1x128xf32>
    %373 = vector.shape_cast %372 : vector<1x1x1x128xf32> to vector<1x128xf32>
    %374 = vector.shape_cast %371 : vector<1x128xf32> to vector<1x1x1x128xf32>
    tpu.vector_store %arg5[%c0_328, %c6_329, %c0_330, %c0_331], %374 {strides = array<i32>} : memref<1x10x8x128xf32, #tpu.memory_space<vmem>>, vector<1x1x1x128xf32>,
    %c0_332 = arith.constant 0 : index
    %c6_333 = arith.constant 6 : index
    %c0_334 = arith.constant 0 : index
    %c0_335 = arith.constant 0 : index
    %375 = vector.load %arg6[%c0_332, %c6_333, %c0_334, %c0_335] : memref<1x10x8x128xf32, #tpu.memory_space<vmem>>, vector<1x1x1x128xf32>
    %376 = vector.shape_cast %375 : vector<1x1x1x128xf32> to vector<1x128xf32>
    %cst_336 = arith.constant 0.000000e+00 : f32
    %377 = vector.broadcast %cst_336 : f32 to vector<2x128xf32>
    %378 = arith.select %364, %230, %377 : vector<2x128xi1>, vector<2x128xf32>
    %cst_337 = arith.constant dense<0.000000e+00> : vector<128xf32>
    %379 = vector.multi_reduction <add>, %378, %cst_337 [0] : vector<2x128xf32> to vector<128xf32>
    %380 = vector.shape_cast %379 : vector<128xf32> to vector<1x128xf32>
    %381 = arith.addf %376, %380 : vector<1x128xf32>
    %c0_338 = arith.constant 0 : index
    %c6_339 = arith.constant 6 : index
    %c0_340 = arith.constant 0 : index
    %c0_341 = arith.constant 0 : index
    %382 = vector.load %arg6[%c0_338, %c6_339, %c0_340, %c0_341] : memref<1x10x8x128xf32, #tpu.memory_space<vmem>>, vector<1x1x1x128xf32>
    %383 = vector.shape_cast %382 : vector<1x1x1x128xf32> to vector<1x128xf32>
    %384 = vector.shape_cast %381 : vector<1x128xf32> to vector<1x1x1x128xf32>
    tpu.vector_store %arg6[%c0_338, %c6_339, %c0_340, %c0_341], %384 {strides = array<i32>} : memref<1x10x8x128xf32, #tpu.memory_space<vmem>>, vector<1x1x1x128xf32>,
    %cst_342 = arith.constant 7.000000e+00 : f32
    %385 = vector.broadcast %cst_342 : f32 to vector<2x128xf32>
    %386 = arith.cmpf oeq, %229, %385 : vector<2x128xf32>
    %c0_343 = arith.constant 0 : index
    %c7_344 = arith.constant 7 : index
    %c0_345 = arith.constant 0 : index
    %c0_346 = arith.constant 0 : index
    %387 = vector.load %arg5[%c0_343, %c7_344, %c0_345, %c0_346] : memref<1x10x8x128xf32, #tpu.memory_space<vmem>>, vector<1x1x1x128xf32>
    %388 = vector.shape_cast %387 : vector<1x1x1x128xf32> to vector<1x128xf32>
    %389 = arith.extui %386 : vector<2x128xi1> to vector<2x128xi32>
    %390 = arith.sitofp %389 : vector<2x128xi32> to vector<2x128xf32>
    %cst_347 = arith.constant dense<0.000000e+00> : vector<128xf32>
    %391 = vector.multi_reduction <add>, %390, %cst_347 [0] : vector<2x128xf32> to vector<128xf32>
    %392 = vector.shape_cast %391 : vector<128xf32> to vector<1x128xf32>
    %393 = arith.addf %388, %392 : vector<1x128xf32>
    %c0_348 = arith.constant 0 : index
    %c7_349 = arith.constant 7 : index
    %c0_350 = arith.constant 0 : index
    %c0_351 = arith.constant 0 : index
    %394 = vector.load %arg5[%c0_348, %c7_349, %c0_350, %c0_351] : memref<1x10x8x128xf32, #tpu.memory_space<vmem>>, vector<1x1x1x128xf32>
    %395 = vector.shape_cast %394 : vector<1x1x1x128xf32> to vector<1x128xf32>
    %396 = vector.shape_cast %393 : vector<1x128xf32> to vector<1x1x1x128xf32>
    tpu.vector_store %arg5[%c0_348, %c7_349, %c0_350, %c0_351], %396 {strides = array<i32>} : memref<1x10x8x128xf32, #tpu.memory_space<vmem>>, vector<1x1x1x128xf32>,
    %c0_352 = arith.constant 0 : index
    %c7_353 = arith.constant 7 : index
    %c0_354 = arith.constant 0 : index
    %c0_355 = arith.constant 0 : index
    %397 = vector.load %arg6[%c0_352, %c7_353, %c0_354, %c0_355] : memref<1x10x8x128xf32, #tpu.memory_space<vmem>>, vector<1x1x1x128xf32>
    %398 = vector.shape_cast %397 : vector<1x1x1x128xf32> to vector<1x128xf32>
    %cst_356 = arith.constant 0.000000e+00 : f32
    %399 = vector.broadcast %cst_356 : f32 to vector<2x128xf32>
    %400 = arith.select %386, %230, %399 : vector<2x128xi1>, vector<2x128xf32>
    %cst_357 = arith.constant dense<0.000000e+00> : vector<128xf32>
    %401 = vector.multi_reduction <add>, %400, %cst_357 [0] : vector<2x128xf32> to vector<128xf32>
    %402 = vector.shape_cast %401 : vector<128xf32> to vector<1x128xf32>
    %403 = arith.addf %398, %402 : vector<1x128xf32>
    %c0_358 = arith.constant 0 : index
    %c7_359 = arith.constant 7 : index
    %c0_360 = arith.constant 0 : index
    %c0_361 = arith.constant 0 : index
    %404 = vector.load %arg6[%c0_358, %c7_359, %c0_360, %c0_361] : memref<1x10x8x128xf32, #tpu.memory_space<vmem>>, vector<1x1x1x128xf32>
    %405 = vector.shape_cast %404 : vector<1x1x1x128xf32> to vector<1x128xf32>
    %406 = vector.shape_cast %403 : vector<1x128xf32> to vector<1x1x1x128xf32>
    tpu.vector_store %arg6[%c0_358, %c7_359, %c0_360, %c0_361], %406 {strides = array<i32>} : memref<1x10x8x128xf32, #tpu.memory_space<vmem>>, vector<1x1x1x128xf32>,
    %cst_362 = arith.constant 8.000000e+00 : f32
    %407 = vector.broadcast %cst_362 : f32 to vector<2x128xf32>
    %408 = arith.cmpf oeq, %229, %407 : vector<2x128xf32>
    %c0_363 = arith.constant 0 : index
    %c8_364 = arith.constant 8 : index
    %c0_365 = arith.constant 0 : index
    %c0_366 = arith.constant 0 : index
    %409 = vector.load %arg5[%c0_363, %c8_364, %c0_365, %c0_366] : memref<1x10x8x128xf32, #tpu.memory_space<vmem>>, vector<1x1x1x128xf32>
    %410 = vector.shape_cast %409 : vector<1x1x1x128xf32> to vector<1x128xf32>
    %411 = arith.extui %408 : vector<2x128xi1> to vector<2x128xi32>
    %412 = arith.sitofp %411 : vector<2x128xi32> to vector<2x128xf32>
    %cst_367 = arith.constant dense<0.000000e+00> : vector<128xf32>
    %413 = vector.multi_reduction <add>, %412, %cst_367 [0] : vector<2x128xf32> to vector<128xf32>
    %414 = vector.shape_cast %413 : vector<128xf32> to vector<1x128xf32>
    %415 = arith.addf %410, %414 : vector<1x128xf32>
    %c0_368 = arith.constant 0 : index
    %c8_369 = arith.constant 8 : index
    %c0_370 = arith.constant 0 : index
    %c0_371 = arith.constant 0 : index
    %416 = vector.load %arg5[%c0_368, %c8_369, %c0_370, %c0_371] : memref<1x10x8x128xf32, #tpu.memory_space<vmem>>, vector<1x1x1x128xf32>
    %417 = vector.shape_cast %416 : vector<1x1x1x128xf32> to vector<1x128xf32>
    %418 = vector.shape_cast %415 : vector<1x128xf32> to vector<1x1x1x128xf32>
    tpu.vector_store %arg5[%c0_368, %c8_369, %c0_370, %c0_371], %418 {strides = array<i32>} : memref<1x10x8x128xf32, #tpu.memory_space<vmem>>, vector<1x1x1x128xf32>,
    %c0_372 = arith.constant 0 : index
    %c8_373 = arith.constant 8 : index
    %c0_374 = arith.constant 0 : index
    %c0_375 = arith.constant 0 : index
    %419 = vector.load %arg6[%c0_372, %c8_373, %c0_374, %c0_375] : memref<1x10x8x128xf32, #tpu.memory_space<vmem>>, vector<1x1x1x128xf32>
    %420 = vector.shape_cast %419 : vector<1x1x1x128xf32> to vector<1x128xf32>
    %cst_376 = arith.constant 0.000000e+00 : f32
    %421 = vector.broadcast %cst_376 : f32 to vector<2x128xf32>
    %422 = arith.select %408, %230, %421 : vector<2x128xi1>, vector<2x128xf32>
    %cst_377 = arith.constant dense<0.000000e+00> : vector<128xf32>
    %423 = vector.multi_reduction <add>, %422, %cst_377 [0] : vector<2x128xf32> to vector<128xf32>
    %424 = vector.shape_cast %423 : vector<128xf32> to vector<1x128xf32>
    %425 = arith.addf %420, %424 : vector<1x128xf32>
    %c0_378 = arith.constant 0 : index
    %c8_379 = arith.constant 8 : index
    %c0_380 = arith.constant 0 : index
    %c0_381 = arith.constant 0 : index
    %426 = vector.load %arg6[%c0_378, %c8_379, %c0_380, %c0_381] : memref<1x10x8x128xf32, #tpu.memory_space<vmem>>, vector<1x1x1x128xf32>
    %427 = vector.shape_cast %426 : vector<1x1x1x128xf32> to vector<1x128xf32>
    %428 = vector.shape_cast %425 : vector<1x128xf32> to vector<1x1x1x128xf32>
    tpu.vector_store %arg6[%c0_378, %c8_379, %c0_380, %c0_381], %428 {strides = array<i32>} : memref<1x10x8x128xf32, #tpu.memory_space<vmem>>, vector<1x1x1x128xf32>,
    %cst_382 = arith.constant 9.000000e+00 : f32
    %429 = vector.broadcast %cst_382 : f32 to vector<2x128xf32>
    %430 = arith.cmpf oeq, %229, %429 : vector<2x128xf32>
    %c0_383 = arith.constant 0 : index
    %c9_384 = arith.constant 9 : index
    %c0_385 = arith.constant 0 : index
    %c0_386 = arith.constant 0 : index
    %431 = vector.load %arg5[%c0_383, %c9_384, %c0_385, %c0_386] : memref<1x10x8x128xf32, #tpu.memory_space<vmem>>, vector<1x1x1x128xf32>
    %432 = vector.shape_cast %431 : vector<1x1x1x128xf32> to vector<1x128xf32>
    %433 = arith.extui %430 : vector<2x128xi1> to vector<2x128xi32>
    %434 = arith.sitofp %433 : vector<2x128xi32> to vector<2x128xf32>
    %cst_387 = arith.constant dense<0.000000e+00> : vector<128xf32>
    %435 = vector.multi_reduction <add>, %434, %cst_387 [0] : vector<2x128xf32> to vector<128xf32>
    %436 = vector.shape_cast %435 : vector<128xf32> to vector<1x128xf32>
    %437 = arith.addf %432, %436 : vector<1x128xf32>
    %c0_388 = arith.constant 0 : index
    %c9_389 = arith.constant 9 : index
    %c0_390 = arith.constant 0 : index
    %c0_391 = arith.constant 0 : index
    %438 = vector.load %arg5[%c0_388, %c9_389, %c0_390, %c0_391] : memref<1x10x8x128xf32, #tpu.memory_space<vmem>>, vector<1x1x1x128xf32>
    %439 = vector.shape_cast %438 : vector<1x1x1x128xf32> to vector<1x128xf32>
    %440 = vector.shape_cast %437 : vector<1x128xf32> to vector<1x1x1x128xf32>
    tpu.vector_store %arg5[%c0_388, %c9_389, %c0_390, %c0_391], %440 {strides = array<i32>} : memref<1x10x8x128xf32, #tpu.memory_space<vmem>>, vector<1x1x1x128xf32>,
    %c0_392 = arith.constant 0 : index
    %c9_393 = arith.constant 9 : index
    %c0_394 = arith.constant 0 : index
    %c0_395 = arith.constant 0 : index
    %441 = vector.load %arg6[%c0_392, %c9_393, %c0_394, %c0_395] : memref<1x10x8x128xf32, #tpu.memory_space<vmem>>, vector<1x1x1x128xf32>
    %442 = vector.shape_cast %441 : vector<1x1x1x128xf32> to vector<1x128xf32>
    %cst_396 = arith.constant 0.000000e+00 : f32
    %443 = vector.broadcast %cst_396 : f32 to vector<2x128xf32>
    %444 = arith.select %430, %230, %443 : vector<2x128xi1>, vector<2x128xf32>
    %cst_397 = arith.constant dense<0.000000e+00> : vector<128xf32>
    %445 = vector.multi_reduction <add>, %444, %cst_397 [0] : vector<2x128xf32> to vector<128xf32>
    %446 = vector.shape_cast %445 : vector<128xf32> to vector<1x128xf32>
    %447 = arith.addf %442, %446 : vector<1x128xf32>
    %c0_398 = arith.constant 0 : index
    %c9_399 = arith.constant 9 : index
    %c0_400 = arith.constant 0 : index
    %c0_401 = arith.constant 0 : index
    %448 = vector.load %arg6[%c0_398, %c9_399, %c0_400, %c0_401] : memref<1x10x8x128xf32, #tpu.memory_space<vmem>>, vector<1x1x1x128xf32>
    %449 = vector.shape_cast %448 : vector<1x1x1x128xf32> to vector<1x128xf32>
    %450 = vector.shape_cast %447 : vector<1x128xf32> to vector<1x1x1x128xf32>
    tpu.vector_store %arg6[%c0_398, %c9_399, %c0_400, %c0_401], %450 {strides = array<i32>} : memref<1x10x8x128xf32, #tpu.memory_space<vmem>>, vector<1x1x1x128xf32>,
    return
  }
  func.func @transform_0(%arg0: i32, %arg1: i32) -> (i32, i32) {
    %c1_i32 = arith.constant 1 : i32
    %0 = arith.muli %arg0, %c1_i32 : i32
    %1 = arith.addi %0, %arg1 : i32
    %c0_i32 = arith.constant 0 : i32
    %2 = arith.minsi %1, %c0_i32 : i32
    %c0_i32_0 = arith.constant 0 : i32
    %c0_i32_1 = arith.constant 0 : i32
    return %2, %c0_i32_0 : i32, i32
  }
  func.func @transform_1(%arg0: i32, %arg1: i32) -> (i32, i32) {
    %c1_i32 = arith.constant 1 : i32
    %0 = arith.muli %arg0, %c1_i32 : i32
    %1 = arith.addi %0, %arg1 : i32
    %c0_i32 = arith.constant 0 : i32
    %2 = arith.minsi %1, %c0_i32 : i32
    %c0_i32_0 = arith.constant 0 : i32
    %c0_i32_1 = arith.constant 0 : i32
    return %2, %c0_i32_0 : i32, i32
  }
  func.func @transform_2(%arg0: i32, %arg1: i32) -> (i32, i32) {
    %c1_i32 = arith.constant 1 : i32
    %0 = arith.muli %arg0, %c1_i32 : i32
    %1 = arith.addi %0, %arg1 : i32
    %c0_i32 = arith.constant 0 : i32
    %2 = arith.minsi %1, %c0_i32 : i32
    %c0_i32_0 = arith.constant 0 : i32
    %c0_i32_1 = arith.constant 0 : i32
    return %2, %c0_i32_0 : i32, i32
  }
  func.func @transform_3(%arg0: i32, %arg1: i32) -> (i32, i32, i32, i32) {
    %c0_i32 = arith.constant 0 : i32
    %c0_i32_0 = arith.constant 0 : i32
    %c0_i32_1 = arith.constant 0 : i32
    %c0_i32_2 = arith.constant 0 : i32
    return %arg0, %c0_i32, %c0_i32_0, %c0_i32_1 : i32, i32, i32, i32
  }
  func.func @transform_4(%arg0: i32, %arg1: i32) -> (i32, i32, i32, i32) {
    %c0_i32 = arith.constant 0 : i32
    %c0_i32_0 = arith.constant 0 : i32
    %c0_i32_1 = arith.constant 0 : i32
    %c0_i32_2 = arith.constant 0 : i32
    return %arg0, %c0_i32, %c0_i32_0, %c0_i32_1 : i32, i32, i32, i32
  }
}

</mosaic_0001>

<llo_original>
// kernel: ghmr_loss.1
$region0: #{ghmr_loss.1}
  #allocation0 [shape = 'u32[]', space=smem, size = 0x4, offset = 0x4, fixed_abs, tag = 'smem constant byte address 0x4 - core index']
  #allocation1 [shape = 'u32[144,128]{1,0:T(1,128)}', space=vmem, size = 0x12000, scoped, tag = 'internal scratch']
  %s0 = inlined_call_operand.vmem [shape: f32[10,128], index: 0, kind: input, shape index: {}]
  %s1 = inlined_call_operand.vmem [shape: f32[10,128], index: 1, kind: input, shape index: {}]
  %s2 = inlined_call_operand.vmem [shape: f32[10,128], index: 2, kind: input, shape index: {}]
  %s3 = inlined_call_operand.vmem [shape: f32[1,10,8,128], index: 3, kind: output, shape index: {0}]
  %s4 = inlined_call_operand.vmem [shape: f32[1,10,8,128], index: 4, kind: output, shape index: {1}]
  %5 = xla_tuple %s3, %s4
  %s6 = sld [smem:[#allocation0]]
  $region34: #{ghmr_loss.1} parent=0
    _
  %s8 = ssub.s32 1, %s6
  %s9 = scalar_select 0, %s8, %s6
  // Predicated region
  $region2: #{ghmr_loss.1} parent=0 // pred_check
    _
  $region3: #{ghmr_loss.1} parent=0 // pred_check_branch
    %11 = sbr.rel (0) target = $region5
  $region4: #{ghmr_loss.1} parent=0 // pred_region
    %s12 = sadd.s32 0, 0
    %p13 = scmp.lt.s32.totalorder %s12, 0
    %s14 = scalar_select %p13, %s12, 0
    %s15 = smul.u32 2, %s14
    %p16 = scmp.lt.s32.totalorder %s15, 1
    %s17 = scalar_select %p16, %s15, 1
    %s18 = smul.addr %s17, 8
    %s19 = scalar_lea.vmem %s0, %s18
    %s20 = sadd.s32 0, 0
    %p21 = scmp.lt.s32.totalorder %s20, 0
    %s22 = scalar_select %p21, %s20, 0
    %s23 = smul.u32 2, %s22
  $region5: #{ghmr_loss.1} parent=0 // pred_fallthru
    _
  // Predicated region
  $region6: #{ghmr_loss.1} parent=0 // pred_check
    _
  $region7: #{ghmr_loss.1} parent=0 // pred_check_branch
    %25 = sbr.rel (0) target = $region9
  $region8: #{ghmr_loss.1} parent=0 // pred_region
    %s26 = sadd.s32 0, 0
    %p27 = scmp.lt.s32.totalorder %s26, 0
    %s28 = scalar_select %p27, %s26, 0
    %s29 = smul.u32 2, %s28
    %p30 = scmp.lt.s32.totalorder %s29, 1
    %s31 = scalar_select %p30, %s29, 1
    %s32 = smul.addr %s31, 8
    %s33 = scalar_lea.vmem %s1, %s32
    %s34 = sadd.s32 0, 0
    %p35 = scmp.lt.s32.totalorder %s34, 0
    %s36 = scalar_select %p35, %s34, 0
    %s37 = smul.u32 2, %s36
  $region9: #{ghmr_loss.1} parent=0 // pred_fallthru
    _
  // Predicated region
  $region10: #{ghmr_loss.1} parent=0 // pred_check
    _
  $region11: #{ghmr_loss.1} parent=0 // pred_check_branch
    %39 = sbr.rel (0) target = $region13
  $region12: #{ghmr_loss.1} parent=0 // pred_region
    %s40 = sadd.s32 0, 0
    %p41 = scmp.lt.s32.totalorder %s40, 0
    %s42 = scalar_select %p41, %s40, 0
    %s43 = smul.u32 2, %s42
    %p44 = scmp.lt.s32.totalorder %s43, 1
    %s45 = scalar_select %p44, %s43, 1
    %s46 = smul.addr %s45, 8
    %s47 = scalar_lea.vmem %s2, %s46
    %s48 = sadd.s32 0, 0
    %p49 = scmp.lt.s32.totalorder %s48, 0
    %s50 = scalar_select %p49, %s48, 0
    %s51 = smul.u32 2, %s50
  $region13: #{ghmr_loss.1} parent=0 // pred_fallthru
    _
  %s52 = sadd.s32 0, 0
  %p53 = scmp.lt.s32.totalorder %s52, 0
  %s54 = scalar_select %p53, %s52, 0
  %s55 = smul.u32 2, %s54
  %p56 = scmp.lt.s32.totalorder %s55, 1
  %s57 = scalar_select %p56, %s55, 1
  %s58 = smul.addr %s57, 8
  %s59 = scalar_lea.vmem %s0, %s58
  %s60 = sadd.s32 0, 0
  %p61 = scmp.lt.s32.totalorder %s60, 0
  %s62 = scalar_select %p61, %s60, 0
  %s63 = smul.u32 2, %s62
  %p64 = scmp.lt.s32.totalorder %s63, 1
  %s65 = scalar_select %p64, %s63, 1
  %s66 = smul.addr %s65, 8
  %s67 = scalar_lea.vmem %s1, %s66
  %s68 = sadd.s32 0, 0
  %p69 = scmp.lt.s32.totalorder %s68, 0
  %s70 = scalar_select %p69, %s68, 0
  %s71 = smul.u32 2, %s70
  %p72 = scmp.lt.s32.totalorder %s71, 1
  %s73 = scalar_select %p72, %s71, 1
  %s74 = smul.addr %s73, 8
  %s75 = scalar_lea.vmem %s2, %s74
  %s76 = sadd.s32 0, 0
  %p77 = scmp.lt.s32.totalorder %s76, 0
  %s78 = scalar_select %p77, %s76, 0
  %s79 = smul.u32 2, %s78
  %p80 = scmp.lt.s32.totalorder %s79, 1
  %s81 = scalar_select %p80, %s79, 1
  %s82 = smul.addr %s81, 8
  %s83 = scalar_lea.vmem %s0, %s82
  %s84 = sadd.s32 0, 0
  %p85 = scmp.lt.s32.totalorder %s84, 0
  %s86 = scalar_select %p85, %s84, 0
  %s87 = smul.u32 2, %s86
  %s88 = sadd.s32 0, 0
  %p89 = scmp.lt.s32.totalorder %s88, 0
  %s90 = scalar_select %p89, %s88, 0
  %s91 = smul.u32 2, %s90
  %p92 = scmp.lt.s32.totalorder %s91, 1
  %s93 = scalar_select %p92, %s91, 1
  %s94 = smul.addr %s93, 8
  %s95 = scalar_lea.vmem %s1, %s94
  %s96 = sadd.s32 0, 0
  %p97 = scmp.lt.s32.totalorder %s96, 0
  %s98 = scalar_select %p97, %s96, 0
  %s99 = smul.u32 2, %s98
  %s100 = sadd.s32 0, 0
  %p101 = scmp.lt.s32.totalorder %s100, 0
  %s102 = scalar_select %p101, %s100, 0
  %s103 = smul.u32 2, %s102
  %p104 = scmp.lt.s32.totalorder %s103, 1
  %s105 = scalar_select %p104, %s103, 1
  %s106 = smul.addr %s105, 8
  %s107 = scalar_lea.vmem %s2, %s106
  %s108 = sadd.s32 0, 0
  %p109 = scmp.lt.s32.totalorder %s108, 0
  %s110 = scalar_select %p109, %s108, 0
  %s111 = smul.u32 2, %s110
  %p112 = scmp.eq.s32.totalorder 0, 0
  // Predicated region
  $region14: #{ghmr_loss.1} parent=0 // pred_check
    %p113 = pneg %p112
  $region15: #{ghmr_loss.1} parent=0 // pred_check_branch
    %115 = sbr.rel (%p113) target = $region17
  $region16: #{ghmr_loss.1} parent=0 // pred_region
    %116 = vst [vmem:[%s3] sm:$0xff] 0.0
    %117 = vst [vmem:[%s3 + $0x8] sm:$0xff] 0.0
    %118 = vst [vmem:[%s3 + $0x10] sm:$0xff] 0.0
    %119 = vst [vmem:[%s3 + $0x18] sm:$0xff] 0.0
    %120 = vst [vmem:[%s3 + $0x20] sm:$0xff] 0.0
    %121 = vst [vmem:[%s3 + $0x28] sm:$0xff] 0.0
    %122 = vst [vmem:[%s3 + $0x30] sm:$0xff] 0.0
    %123 = vst [vmem:[%s3 + $0x38] sm:$0xff] 0.0
    %124 = vst [vmem:[%s3 + $0x40] sm:$0xff] 0.0
    %125 = vst [vmem:[%s3 + $0x48] sm:$0xff] 0.0
    %126 = vst [vmem:[%s4] sm:$0xff] 0.0
    %127 = vst [vmem:[%s4 + $0x8] sm:$0xff] 0.0
    %128 = vst [vmem:[%s4 + $0x10] sm:$0xff] 0.0
    %129 = vst [vmem:[%s4 + $0x18] sm:$0xff] 0.0
    %130 = vst [vmem:[%s4 + $0x20] sm:$0xff] 0.0
    %131 = vst [vmem:[%s4 + $0x28] sm:$0xff] 0.0
    %132 = vst [vmem:[%s4 + $0x30] sm:$0xff] 0.0
    %133 = vst [vmem:[%s4 + $0x38] sm:$0xff] 0.0
    %134 = vst [vmem:[%s4 + $0x40] sm:$0xff] 0.0
    %135 = vst [vmem:[%s4 + $0x48] sm:$0xff] 0.0
  $region17: #{ghmr_loss.1} parent=0 // pred_fallthru
    _
  %v136 = vld [vmem:[%s83] sm:$0xff]
  %v137 = vld [vmem:[%s83 + $0x8] sm:$0x3]
  %v138 = vld [vmem:[%s95] sm:$0xff]
  %v139 = vld [vmem:[%s95 + $0x8] sm:$0x3]
  %v140 = vld [vmem:[%s107] sm:$0xff]
  %v141 = vld [vmem:[%s107 + $0x8] sm:$0x3]
  %v142 = vsub.f32 %v136, %v138
  %v143 = vsub.f32 %v137, %v139
  %v144 = vmul.f32 %v142, %v142
  %v145 = vmul.f32 %v143, %v143
  %v146 = vadd.f32 %v144, 0.0004
  %v147 = vadd.f32 %v145, 0.0004
  %v148 = vrsqrt.pop %v146
  %v149 = vrsqrt.pop %v147
  %v150 = vmul.f32 %v146, %v148
  %v151 = vmul.f32 %v147, %v149
  %v152 = vsub.f32 %v150, 0.02
  %v153 = vsub.f32 %v151, 0.02
  %v154 = vand.u32 2147483647, %v142
  %v155 = vand.u32 2147483647, %v143
  %v156 = vmul.f32 %v154, %v148
  %v157 = vmul.f32 %v155, %v149
  %v158 = vmul.f32 %v156, 10.0
  %v159 = vmul.f32 %v157, 10.0
  %v160 = vfloor.f32 %v158
  %v161 = vfloor.f32 %v159
  %v162 = vmin.f32 %v160, 9.0
  %v163 = vmin.f32 %v161, 9.0
  %vm164 = vcmp.gt.f32.partialorder %v140, 0.0
  %vm165 = vcmp.gt.f32.partialorder %v141, 0.0
  %v166 = vsel %vm164, %v162, 10.0
  %v167 = vsel %vm165, %v163, 10.0
  %vm168 = vcmp.eq.f32.partialorder %v166, 0.0
  %v169 = vld [vmem:[%s3] sm:$0xff]
  %v170 = vsel %vm168, 1, 0
  %v171 = vcvt.s32.f32 %v170
  %v172 = vadd.f32 %v171, 0.0
  %v173 = vadd.f32 %v169, %v172
  %174 = vst [vmem:[%s3] sm:$0xff] %v173
  %v175 = vld [vmem:[%s4] sm:$0xff]
  %v176 = vsel %vm168, %v152, 0.0
  %v177 = vadd.f32 %v176, 0.0
  %v178 = vadd.f32 %v175, %v177
  %179 = vst [vmem:[%s4] sm:$0xff] %v178
  %vm180 = vcmp.eq.f32.partialorder %v166, 1.0
  %s181 = scalar_lea.vmem %s3, 8
  %v182 = vld [vmem:[%s181] sm:$0xff]
  %v183 = vsel %vm180, 1, 0
  %v184 = vcvt.s32.f32 %v183
  %v185 = vadd.f32 %v184, 0.0
  %v186 = vadd.f32 %v182, %v185
  %187 = vst [vmem:[%s181] sm:$0xff] %v186
  %s188 = scalar_lea.vmem %s4, 8
  %v189 = vld [vmem:[%s188] sm:$0xff]
  %v190 = vsel %vm180, %v152, 0.0
  %v191 = vadd.f32 %v190, 0.0
  %v192 = vadd.f32 %v189, %v191
  %193 = vst [vmem:[%s188] sm:$0xff] %v192
  %vm194 = vcmp.eq.f32.partialorder %v166, 2.0
  %s195 = scalar_lea.vmem %s3, 16
  %v196 = vld [vmem:[%s195] sm:$0xff]
  %v197 = vsel %vm194, 1, 0
  %v198 = vcvt.s32.f32 %v197
  %v199 = vadd.f32 %v198, 0.0
  %v200 = vadd.f32 %v196, %v199
  %201 = vst [vmem:[%s195] sm:$0xff] %v200
  %s202 = scalar_lea.vmem %s4, 16
  %v203 = vld [vmem:[%s202] sm:$0xff]
  %v204 = vsel %vm194, %v152, 0.0
  %v205 = vadd.f32 %v204, 0.0
  %v206 = vadd.f32 %v203, %v205
  %207 = vst [vmem:[%s202] sm:$0xff] %v206
  %vm208 = vcmp.eq.f32.partialorder %v166, 3.0
  %s209 = scalar_lea.vmem %s3, 24
  %v210 = vld [vmem:[%s209] sm:$0xff]
  %v211 = vsel %vm208, 1, 0
  %v212 = vcvt.s32.f32 %v211
  %v213 = vadd.f32 %v212, 0.0
  %v214 = vadd.f32 %v210, %v213
  %215 = vst [vmem:[%s209] sm:$0xff] %v214
  %s216 = scalar_lea.vmem %s4, 24
  %v217 = vld [vmem:[%s216] sm:$0xff]
  %v218 = vsel %vm208, %v152, 0.0
  %v219 = vadd.f32 %v218, 0.0
  %v220 = vadd.f32 %v217, %v219
  %221 = vst [vmem:[%s216] sm:$0xff] %v220
  %vm222 = vcmp.eq.f32.partialorder %v166, 4.0
  %s223 = scalar_lea.vmem %s3, 32
  %v224 = vld [vmem:[%s223] sm:$0xff]
  %v225 = vsel %vm222, 1, 0
  %v226 = vcvt.s32.f32 %v225
  %v227 = vadd.f32 %v226, 0.0
  %v228 = vadd.f32 %v224, %v227
  %229 = vst [vmem:[%s223] sm:$0xff] %v228
  %s230 = scalar_lea.vmem %s4, 32
  %v231 = vld [vmem:[%s230] sm:$0xff]
  %v232 = vsel %vm222, %v152, 0.0
  %v233 = vadd.f32 %v232, 0.0
  %v234 = vadd.f32 %v231, %v233
  %235 = vst [vmem:[%s230] sm:$0xff] %v234
  %vm236 = vcmp.eq.f32.partialorder %v166, 5.0
  %s237 = scalar_lea.vmem %s3, 40
  %v238 = vld [vmem:[%s237] sm:$0xff]
  %v239 = vsel %vm236, 1, 0
  %v240 = vcvt.s32.f32 %v239
  %v241 = vadd.f32 %v240, 0.0
  %v242 = vadd.f32 %v238, %v241
  %243 = vst [vmem:[%s237] sm:$0xff] %v242
  %s244 = scalar_lea.vmem %s4, 40
  %v245 = vld [vmem:[%s244] sm:$0xff]
  %v246 = vsel %vm236, %v152, 0.0
  %v247 = vadd.f32 %v246, 0.0
  %v248 = vadd.f32 %v245, %v247
  %249 = vst [vmem:[%s244] sm:$0xff] %v248
  %vm250 = vcmp.eq.f32.partialorder %v166, 6.0
  %s251 = scalar_lea.vmem %s3, 48
  %v252 = vld [vmem:[%s251] sm:$0xff]
  %v253 = vsel %vm250, 1, 0
  %v254 = vcvt.s32.f32 %v253
  %v255 = vadd.f32 %v254, 0.0
  %v256 = vadd.f32 %v252, %v255
  %257 = vst [vmem:[%s251] sm:$0xff] %v256
  %s258 = scalar_lea.vmem %s4, 48
  %v259 = vld [vmem:[%s258] sm:$0xff]
  %v260 = vsel %vm250, %v152, 0.0
  %v261 = vadd.f32 %v260, 0.0
  %v262 = vadd.f32 %v259, %v261
  %263 = vst [vmem:[%s258] sm:$0xff] %v262
  %vm264 = vcmp.eq.f32.partialorder %v166, 7.0
  %s265 = scalar_lea.vmem %s3, 56
  %v266 = vld [vmem:[%s265] sm:$0xff]
  %v267 = vsel %vm264, 1, 0
  %v268 = vcvt.s32.f32 %v267
  %v269 = vadd.f32 %v268, 0.0
  %v270 = vadd.f32 %v266, %v269
  %271 = vst [vmem:[%s265] sm:$0xff] %v270
  %s272 = scalar_lea.vmem %s4, 56
  %v273 = vld [vmem:[%s272] sm:$0xff]
  %v274 = vsel %vm264, %v152, 0.0
  %v275 = vadd.f32 %v274, 0.0
  %v276 = vadd.f32 %v273, %v275
  %277 = vst [vmem:[%s272] sm:$0xff] %v276
  %vm278 = vcmp.eq.f32.partialorder %v166, 8.0
  %s279 = scalar_lea.vmem %s3, 64
  %v280 = vld [vmem:[%s279] sm:$0xff]
  %v281 = vsel %vm278, 1, 0
  %v282 = vcvt.s32.f32 %v281
  %v283 = vadd.f32 %v282, 0.0
  %v284 = vadd.f32 %v280, %v283
  %285 = vst [vmem:[%s279] sm:$0xff] %v284
  %s286 = scalar_lea.vmem %s4, 64
  %v287 = vld [vmem:[%s286] sm:$0xff]
  %v288 = vsel %vm278, %v152, 0.0
  %v289 = vadd.f32 %v288, 0.0
  %v290 = vadd.f32 %v287, %v289
  %291 = vst [vmem:[%s286] sm:$0xff] %v290
  %vm292 = vcmp.eq.f32.partialorder %v166, 9.0
  %s293 = scalar_lea.vmem %s3, 72
  %v294 = vld [vmem:[%s293] sm:$0xff]
  %v295 = vsel %vm292, 1, 0
  %v296 = vcvt.s32.f32 %v295
  %v297 = vadd.f32 %v296, 0.0
  %v298 = vadd.f32 %v294, %v297
  %299 = vst [vmem:[%s293] sm:$0xff] %v298
  %s300 = scalar_lea.vmem %s4, 72
  %v301 = vld [vmem:[%s300] sm:$0xff]
  %v302 = vsel %vm292, %v152, 0.0
  %v303 = vadd.f32 %v302, 0.0
  %v304 = vadd.f32 %v301, %v303
  %305 = vst [vmem:[%s300] sm:$0xff] %v304
  %vm306 = vcmp.eq.f32.partialorder %v167, 0.0
  %v307 = vld [vmem:[%s3] sm:$0x1]
  %v308 = vsel %vm306, 1, 0
  %v309 = vcvt.s32.f32 %v308
  %vm310 = vcmask 1041408
  %v311 = vsel %vm310, %v309, 0.0
  %v312 = vrot.slane %v311, 4
  %v313 = vadd.f32 %v311, %v312
  %v314 = vrot.slane %v313, 2
  %v315 = vadd.f32 %v313, %v314
  %v316 = vrot.slane %v315, 1
  %v317 = vadd.f32 %v315, %v316
  %v318 = vadd.f32 %v307, %v317
  %319 = vst [vmem:[%s3] sm:$0x1] %v318
  %v320 = vld [vmem:[%s4] sm:$0x1]
  %v321 = vsel %vm306, %v153, 0.0
  %v322 = vsel %vm310, %v321, 0.0
  %v323 = vrot.slane %v322, 4
  %v324 = vadd.f32 %v322, %v323
  %v325 = vrot.slane %v324, 2
  %v326 = vadd.f32 %v324, %v325
  %v327 = vrot.slane %v326, 1
  %v328 = vadd.f32 %v326, %v327
  %v329 = vadd.f32 %v320, %v328
  %330 = vst [vmem:[%s4] sm:$0x1] %v329
  %vm331 = vcmp.eq.f32.partialorder %v167, 1.0
  %v332 = vld [vmem:[%s181] sm:$0x1]
  %v333 = vsel %vm331, 1, 0
  %v334 = vcvt.s32.f32 %v333
  %v335 = vsel %vm310, %v334, 0.0
  %v336 = vrot.slane %v335, 4
  %v337 = vadd.f32 %v335, %v336
  %v338 = vrot.slane %v337, 2
  %v339 = vadd.f32 %v337, %v338
  %v340 = vrot.slane %v339, 1
  %v341 = vadd.f32 %v339, %v340
  %v342 = vadd.f32 %v332, %v341
  %343 = vst [vmem:[%s181] sm:$0x1] %v342
  %v344 = vld [vmem:[%s188] sm:$0x1]
  %v345 = vsel %vm331, %v153, 0.0
  %v346 = vsel %vm310, %v345, 0.0
  %v347 = vrot.slane %v346, 4
  %v348 = vadd.f32 %v346, %v347
  %v349 = vrot.slane %v348, 2
  %v350 = vadd.f32 %v348, %v349
  %v351 = vrot.slane %v350, 1
  %v352 = vadd.f32 %v350, %v351
  %v353 = vadd.f32 %v344, %v352
  %354 = vst [vmem:[%s188] sm:$0x1] %v353
  %vm355 = vcmp.eq.f32.partialorder %v167, 2.0
  %v356 = vld [vmem:[%s195] sm:$0x1]
  %v357 = vsel %vm355, 1, 0
  %v358 = vcvt.s32.f32 %v357
  %v359 = vsel %vm310, %v358, 0.0
  %v360 = vrot.slane %v359, 4
  %v361 = vadd.f32 %v359, %v360
  %v362 = vrot.slane %v361, 2
  %v363 = vadd.f32 %v361, %v362
  %v364 = vrot.slane %v363, 1
  %v365 = vadd.f32 %v363, %v364
  %v366 = vadd.f32 %v356, %v365
  %367 = vst [vmem:[%s195] sm:$0x1] %v366
  %v368 = vld [vmem:[%s202] sm:$0x1]
  %v369 = vsel %vm355, %v153, 0.0
  %v370 = vsel %vm310, %v369, 0.0
  %v371 = vrot.slane %v370, 4
  %v372 = vadd.f32 %v370, %v371
  %v373 = vrot.slane %v372, 2
  %v374 = vadd.f32 %v372, %v373
  %v375 = vrot.slane %v374, 1
  %v376 = vadd.f32 %v374, %v375
  %v377 = vadd.f32 %v368, %v376
  %378 = vst [vmem:[%s202] sm:$0x1] %v377
  %vm379 = vcmp.eq.f32.partialorder %v167, 3.0
  %v380 = vld [vmem:[%s209] sm:$0x1]
  %v381 = vsel %vm379, 1, 0
  %v382 = vcvt.s32.f32 %v381
  %v383 = vsel %vm310, %v382, 0.0
  %v384 = vrot.slane %v383, 4
  %v385 = vadd.f32 %v383, %v384
  %v386 = vrot.slane %v385, 2
  %v387 = vadd.f32 %v385, %v386
  %v388 = vrot.slane %v387, 1
  %v389 = vadd.f32 %v387, %v388
  %v390 = vadd.f32 %v380, %v389
  %391 = vst [vmem:[%s209] sm:$0x1] %v390
  %v392 = vld [vmem:[%s216] sm:$0x1]
  %v393 = vsel %vm379, %v153, 0.0
  %v394 = vsel %vm310, %v393, 0.0
  %v395 = vrot.slane %v394, 4
  %v396 = vadd.f32 %v394, %v395
  %v397 = vrot.slane %v396, 2
  %v398 = vadd.f32 %v396, %v397
  %v399 = vrot.slane %v398, 1
  %v400 = vadd.f32 %v398, %v399
  %v401 = vadd.f32 %v392, %v400
  %402 = vst [vmem:[%s216] sm:$0x1] %v401
  %vm403 = vcmp.eq.f32.partialorder %v167, 4.0
  %v404 = vld [vmem:[%s223] sm:$0x1]
  %v405 = vsel %vm403, 1, 0
  %v406 = vcvt.s32.f32 %v405
  %v407 = vsel %vm310, %v406, 0.0
  %v408 = vrot.slane %v407, 4
  %v409 = vadd.f32 %v407, %v408
  %v410 = vrot.slane %v409, 2
  %v411 = vadd.f32 %v409, %v410
  %v412 = vrot.slane %v411, 1
  %v413 = vadd.f32 %v411, %v412
  %v414 = vadd.f32 %v404, %v413
  %415 = vst [vmem:[%s223] sm:$0x1] %v414
  %v416 = vld [vmem:[%s230] sm:$0x1]
  %v417 = vsel %vm403, %v153, 0.0
  %v418 = vsel %vm310, %v417, 0.0
  %v419 = vrot.slane %v418, 4
  %v420 = vadd.f32 %v418, %v419
  %v421 = vrot.slane %v420, 2
  %v422 = vadd.f32 %v420, %v421
  %v423 = vrot.slane %v422, 1
  %v424 = vadd.f32 %v422, %v423
  %v425 = vadd.f32 %v416, %v424
  %426 = vst [vmem:[%s230] sm:$0x1] %v425
  %vm427 = vcmp.eq.f32.partialorder %v167, 5.0
  %v428 = vld [vmem:[%s237] sm:$0x1]
  %v429 = vsel %vm427, 1, 0
  %v430 = vcvt.s32.f32 %v429
  %v431 = vsel %vm310, %v430, 0.0
  %v432 = vrot.slane %v431, 4
  %v433 = vadd.f32 %v431, %v432
  %v434 = vrot.slane %v433, 2
  %v435 = vadd.f32 %v433, %v434
  %v436 = vrot.slane %v435, 1
  %v437 = vadd.f32 %v435, %v436
  %v438 = vadd.f32 %v428, %v437
  %439 = vst [vmem:[%s237] sm:$0x1] %v438
  %v440 = vld [vmem:[%s244] sm:$0x1]
  %v441 = vsel %vm427, %v153, 0.0
  %v442 = vsel %vm310, %v441, 0.0
  %v443 = vrot.slane %v442, 4
  %v444 = vadd.f32 %v442, %v443
  %v445 = vrot.slane %v444, 2
  %v446 = vadd.f32 %v444, %v445
  %v447 = vrot.slane %v446, 1
  %v448 = vadd.f32 %v446, %v447
  %v449 = vadd.f32 %v440, %v448
  %450 = vst [vmem:[%s244] sm:$0x1] %v449
  %vm451 = vcmp.eq.f32.partialorder %v167, 6.0
  %v452 = vld [vmem:[%s251] sm:$0x1]
  %v453 = vsel %vm451, 1, 0
  %v454 = vcvt.s32.f32 %v453
  %v455 = vsel %vm310, %v454, 0.0
  %v456 = vrot.slane %v455, 4
  %v457 = vadd.f32 %v455, %v456
  %v458 = vrot.slane %v457, 2
  %v459 = vadd.f32 %v457, %v458
  %v460 = vrot.slane %v459, 1
  %v461 = vadd.f32 %v459, %v460
  %v462 = vadd.f32 %v452, %v461
  %463 = vst [vmem:[%s251] sm:$0x1] %v462
  %v464 = vld [vmem:[%s258] sm:$0x1]
  %v465 = vsel %vm451, %v153, 0.0
  %v466 = vsel %vm310, %v465, 0.0
  %v467 = vrot.slane %v466, 4
  %v468 = vadd.f32 %v466, %v467
  %v469 = vrot.slane %v468, 2
  %v470 = vadd.f32 %v468, %v469
  %v471 = vrot.slane %v470, 1
  %v472 = vadd.f32 %v470, %v471
  %v473 = vadd.f32 %v464, %v472
  %474 = vst [vmem:[%s258] sm:$0x1] %v473
  %vm475 = vcmp.eq.f32.partialorder %v167, 7.0
  %v476 = vld [vmem:[%s265] sm:$0x1]
  %v477 = vsel %vm475, 1, 0
  %v478 = vcvt.s32.f32 %v477
  %v479 = vsel %vm310, %v478, 0.0
  %v480 = vrot.slane %v479, 4
  %v481 = vadd.f32 %v479, %v480
  %v482 = vrot.slane %v481, 2
  %v483 = vadd.f32 %v481, %v482
  %v484 = vrot.slane %v483, 1
  %v485 = vadd.f32 %v483, %v484
  %v486 = vadd.f32 %v476, %v485
  %487 = vst [vmem:[%s265] sm:$0x1] %v486
  %v488 = vld [vmem:[%s272] sm:$0x1]
  %v489 = vsel %vm475, %v153, 0.0
  %v490 = vsel %vm310, %v489, 0.0
  %v491 = vrot.slane %v490, 4
  %v492 = vadd.f32 %v490, %v491
  %v493 = vrot.slane %v492, 2
  %v494 = vadd.f32 %v492, %v493
  %v495 = vrot.slane %v494, 1
  %v496 = vadd.f32 %v494, %v495
  %v497 = vadd.f32 %v488, %v496
  %498 = vst [vmem:[%s272] sm:$0x1] %v497
  %vm499 = vcmp.eq.f32.partialorder %v167, 8.0
  %v500 = vld [vmem:[%s279] sm:$0x1]
  %v501 = vsel %vm499, 1, 0
  %v502 = vcvt.s32.f32 %v501
  %v503 = vsel %vm310, %v502, 0.0
  %v504 = vrot.slane %v503, 4
  %v505 = vadd.f32 %v503, %v504
  %v506 = vrot.slane %v505, 2
  %v507 = vadd.f32 %v505, %v506
  %v508 = vrot.slane %v507, 1
  %v509 = vadd.f32 %v507, %v508
  %v510 = vadd.f32 %v500, %v509
  %511 = vst [vmem:[%s279] sm:$0x1] %v510
  %v512 = vld [vmem:[%s286] sm:$0x1]
  %v513 = vsel %vm499, %v153, 0.0
  %v514 = vsel %vm310, %v513, 0.0
  %v515 = vrot.slane %v514, 4
  %v516 = vadd.f32 %v514, %v515
  %v517 = vrot.slane %v516, 2
  %v518 = vadd.f32 %v516, %v517
  %v519 = vrot.slane %v518, 1
  %v520 = vadd.f32 %v518, %v519
  %v521 = vadd.f32 %v512, %v520
  %522 = vst [vmem:[%s286] sm:$0x1] %v521
  %vm523 = vcmp.eq.f32.partialorder %v167, 9.0
  %v524 = vld [vmem:[%s293] sm:$0x1]
  %v525 = vsel %vm523, 1, 0
  %v526 = vcvt.s32.f32 %v525
  %v527 = vsel %vm310, %v526, 0.0
  %v528 = vrot.slane %v527, 4
  %v529 = vadd.f32 %v527, %v528
  %v530 = vrot.slane %v529, 2
  %v531 = vadd.f32 %v529, %v530
  %v532 = vrot.slane %v531, 1
  %v533 = vadd.f32 %v531, %v532
  %v534 = vadd.f32 %v524, %v533
  %535 = vst [vmem:[%s293] sm:$0x1] %v534
  %v536 = vld [vmem:[%s300] sm:$0x1]
  %v537 = vsel %vm523, %v153, 0.0
  %v538 = vsel %vm310, %v537, 0.0
  %v539 = vrot.slane %v538, 4
  %v540 = vadd.f32 %v538, %v539
  %v541 = vrot.slane %v540, 2
  %v542 = vadd.f32 %v540, %v541
  %v543 = vrot.slane %v542, 1
  %v544 = vadd.f32 %v542, %v543
  %v545 = vadd.f32 %v536, %v544
  %546 = vst [vmem:[%s300] sm:$0x1] %v545
  // Predicated region
  $region18: #{ghmr_loss.1} parent=0 // pred_check
    _
  $region19: #{ghmr_loss.1} parent=0 // pred_check_branch
    %548 = sbr.rel (0) target = $region21
  $region20: #{ghmr_loss.1} parent=0 // pred_region
    _
  $region21: #{ghmr_loss.1} parent=0 // pred_fallthru
    _
  // Predicated region
  $region22: #{ghmr_loss.1} parent=0 // pred_check
    _
  $region23: #{ghmr_loss.1} parent=0 // pred_check_branch
    %550 = sbr.rel (0) target = $region25
  $region24: #{ghmr_loss.1} parent=0 // pred_region
    _
  $region25: #{ghmr_loss.1} parent=0 // pred_fallthru
    _
  // Predicated region
  $region26: #{ghmr_loss.1} parent=0 // pred_check
    _
  $region27: #{ghmr_loss.1} parent=0 // pred_check_branch
    %552 = sbr.rel (0) target = $region29
  $region28: #{ghmr_loss.1} parent=0 // pred_region
    _
  $region29: #{ghmr_loss.1} parent=0 // pred_fallthru
    _
  // Predicated region
  $region30: #{ghmr_loss.1} parent=0 // pred_check
    _
  $region31: #{ghmr_loss.1} parent=0 // pred_check_branch
    %554 = sbr.rel (0) target = $region33
  $region32: #{ghmr_loss.1} parent=0 // pred_region
    _
  $region33: #{ghmr_loss.1} parent=0 // pred_fallthru
    _

</llo_original>
